<compile_context>
chip_gen: v5e
topology: v5e:2x2
jax: 0.10.0
libtpu: 0.0.40
codegen_flags: <defaults>
</compile_context>

<pallas_src>
import math

import jax
import jax.numpy as jnp
from jax.experimental import pallas as pl
from jax.experimental.pallas import tpu as pltpu


def _round_up(x: int, m: int) -> int:
    return ((x + m - 1) // m) * m


def _tensorcores_per_device() -> int:
    """Best-effort TensorCore count per device (2 only on megacore chips)."""
    try:
        dev = jax.devices()[0]
        for attr in ("num_cores", "core_count"):
            try:
                v = getattr(dev, attr, None)
            except Exception:
                v = None
            if isinstance(v, int) and v > 0:
                return max(1, min(int(v), 2))
        kind = str(getattr(dev, "device_kind", "")).lower()
        if "v7" in kind or "tpu7" in kind:
            return 2
    except Exception:
        pass
    return 1


def _vmem_limit_bytes() -> int:
    """~75% of physical VMEM (96 MiB on 128 MiB chips, 48 MiB on 64 MiB chips)."""
    cap = 64 * 1024 * 1024  # conservative fallback
    try:
        info = pltpu.get_tpu_info()
        v = int(getattr(info, "vmem_capacity_bytes", 0))
        if v > 0:
            cap = v
    except Exception:
        pass
    return max(32 * 1024 * 1024, (3 * cap) // 4)


def graph_convolution(adjacency, input_features, weight, bias=None, *, tm=256,
                      precise=False):
    """Pallas implementation of GraphConvolution.forward (fused, single kernel)."""
    N, F_in = input_features.shape
    F_in_w, F_out = weight.shape
    assert adjacency.shape == (N, N), adjacency.shape
    assert F_in_w == F_in

    f32 = jnp.float32
    mxu_dtype = f32 if precise else jnp.bfloat16

    # ---- lane-dense feature dims (cheap O(N*F) pads) -------------------------
    F_in_p = _round_up(F_in, 128)
    F_out_p = _round_up(F_out, 128)
    # Contraction dim of the aggregation matmul: A columns == support rows.
    K = _round_up(N, 128)

    # ---- row tiling of A / output (rows are never padded) --------------------
    num_cores = _tensorcores_per_device()
    tm = _round_up(max(int(tm), 16), 16)
    # Aim for >= 2 inner steps per core so the A prefetch overlaps compute.
    tm_eff = min(tm, _round_up(pl.cdiv(N, 2 * num_cores), 16))
    n_tiles = pl.cdiv(N, tm_eff)                    # real row tiles
    num_cores = max(1, min(num_cores, n_tiles))     # never let cores collide
    n_tiles_sched = _round_up(n_tiles, num_cores)
    n_inner = n_tiles_sched // num_cores

    # ---- small operands: pad + cast ------------------------------------------
    # X rows padded to K with zeros so support's tail rows are exactly zero.
    x_p = jnp.zeros((K, F_in_p), mxu_dtype).at[:N, :F_in].set(
        input_features.astype(mxu_dtype))
    w_p = jnp.zeros((F_in_p, F_out_p), mxu_dtype).at[:F_in, :F_out].set(
        weight.astype(mxu_dtype))
    b_p = jnp.zeros((1, F_out_p), f32)
    if bias is not None:
        b_p = b_p.at[0, :F_out].set(bias.astype(f32))

    # ---- adjacency: the dominant HBM stream ----------------------------------
    if K == N:
        a_in = adjacency                # untouched; cast per-tile inside the kernel
    else:
        # One fused pad(+cast) pass, columns only (< 1 lane-tile of waste).
        a_in = jnp.pad(adjacency.astype(mxu_dtype), ((0, 0), (0, K - N)))

    def kernel(x_ref, w_ref, a_ref, b_ref, out_ref, support_ref):
        # support = X @ W : once per core (inner step 0), resident in VMEM scratch
        # for every adjacency row tile handled by that core.
        @pl.when(pl.program_id(1) == 0)
        def _():
            support_ref[...] = jnp.dot(
                x_ref[...], w_ref[...], preferred_element_type=jnp.float32
            ).astype(support_ref.dtype)

        a_t = a_ref[...].astype(mxu_dtype)
        acc = jnp.dot(a_t, support_ref[...], preferred_element_type=jnp.float32)
        out_ref[...] = (acc + b_ref[...]).astype(out_ref.dtype)

    def row_map(c, j):
        # Clamp: if n_tiles is odd under a 2-core split, the overflow step simply
        # re-does the last real tile (idempotent rewrite) instead of going OOB.
        return (jnp.minimum(c * n_inner + j, n_tiles - 1), 0)

    def const_map(c, j):
        return (0, 0)

    cost = pl.CostEstimate(
        flops=int(2 * n_tiles_sched * tm_eff * K * F_out_p
                  + num_cores * 2 * K * F_in_p * F_out_p),
        transcendentals=0,
        bytes_accessed=int(N * K * a_in.dtype.itemsize
                           + K * F_in_p * x_p.dtype.itemsize
                           + F_in_p * F_out_p * w_p.dtype.itemsize
                           + F_out_p * 4
                           + N * F_out_p * 4),
    )

    out_p = pl.pallas_call(
        kernel,
        out_shape=jax.ShapeDtypeStruct((N, F_out_p), f32),
        grid_spec=pltpu.PrefetchScalarGridSpec(
            num_scalar_prefetch=0,
            grid=(num_cores, n_inner),
            in_specs=[
                pl.BlockSpec((K, F_in_p), const_map),        # X (resident)
                pl.BlockSpec((F_in_p, F_out_p), const_map),  # W (resident)
                pl.BlockSpec((tm_eff, K), row_map),          # A row tile (streamed)
                pl.BlockSpec((1, F_out_p), const_map),       # bias (resident)
            ],
            out_specs=pl.BlockSpec((tm_eff, F_out_p), row_map),
            scratch_shapes=[pltpu.VMEM((K, F_out_p), mxu_dtype)],   # resident support
        ),
        compiler_params=pltpu.CompilerParams(
            dimension_semantics=("parallel", "arbitrary"),
            vmem_limit_bytes=_vmem_limit_bytes(),
        ),
        cost_estimate=cost,
    )(x_p, w_p, a_in, b_p)

    # Strip feature padding (rows were never padded).
    return out_p[:, :F_out]


def init_params(key, input_dim, output_dim, use_bias=True):
    """Deterministic parameter init mirroring reset_parameters()."""
    # kaiming_uniform_ on a (input_dim, output_dim) tensor: fan_in = output_dim,
    # bound = sqrt(6 / fan_in)  (a=0, mode='fan_in').
    bound = math.sqrt(6.0 / output_dim)
    weight = jax.random.uniform(
        key, (input_dim, output_dim), jnp.float32, minval=-bound, maxval=bound
    )
    bias = jnp.zeros((output_dim,), jnp.float32) if use_bias else None
    return weight, bias


if __name__ == "__main__":
    import numpy as np

    # Deliberately non-tile-aligned sizes: K pads 500 -> 512 (columns of A only),
    # F_in 64 -> 128, F_out 96 -> 128; rows of A / output stay at 500.
    N, F_IN, F_OUT = 500, 64, 96

    key = jax.random.PRNGKey(0)
    k_adj, k_feat, k_w = jax.random.split(key, 3)

    # Dense row-normalized adjacency standing in for the sparse Laplacian.
    adjacency = jax.random.uniform(k_adj, (N, N), jnp.float32)
    adjacency = adjacency / jnp.sum(adjacency, axis=-1, keepdims=True)

    input_features = jax.random.normal(k_feat, (N, F_IN), jnp.float32)
    weight, bias = init_params(k_w, F_IN, F_OUT, use_bias=True)

    # Default path: bf16 MXU inputs, f32 accumulation.
    out = jax.block_until_ready(
        graph_convolution(adjacency, input_features, weight, bias))
    assert out.shape == (N, F_OUT)

    # float64 host reference of the PyTorch forward.
    a64 = np.asarray(adjacency, np.float64)
    x64 = np.asarray(input_features, np.float64)
    w64 = np.asarray(weight, np.float64)
    b64 = np.asarray(bias, np.float64)
    ref = a64 @ (x64 @ w64) + b64

    err = float(np.max(np.abs(np.asarray(out, np.float64) - ref)))
    assert np.allclose(np.asarray(out, np.float64), ref, atol=1e-2, rtol=5e-2), err

    # Precise path: all-f32 operands, near-exact parity with torch's f32 mm.
    out_hi = jax.block_until_ready(
        graph_convolution(adjacency, input_features, weight, bias, precise=True))
    err_hi = float(np.max(np.abs(np.asarray(out_hi, np.float64) - ref)))
    assert np.allclose(np.asarray(out_hi, np.float64), ref, atol=2e-3, rtol=1e-2), err_hi

    print("KERNEL_OK")
</pallas_src>

<mosaic_0001>
module attributes {stable_mosaic.version = 11 : i64} {
  func.func @kernel(%arg0: i32, %arg1: i32, %arg2: memref<512x128xbf16, #tpu.memory_space<vmem>>, %arg3: memref<128x128xbf16, #tpu.memory_space<vmem>>, %arg4: memref<256x512xbf16, #tpu.memory_space<vmem>>, %arg5: memref<1x128xf32, #tpu.memory_space<vmem>>, %arg6: memref<256x128xf32, #tpu.memory_space<vmem>>, %arg7: memref<512x128xbf16, #tpu.memory_space<vmem>>) attributes {dimension_semantics = [#tpu.dimension_semantics<parallel>, #tpu.dimension_semantics<arbitrary>], iteration_bounds = array<i64: 1, 2>, scalar_prefetch = 0 : i64, scratch_operands = 1 : i64, tpu.core_type = #tpu.core_type<tc>, window_params = [{pipeline_mode = #tpu.pipeline_mode<synchronous>, transform_indices = @transform_0, window_bounds = array<i64: 512, 128>}, {pipeline_mode = #tpu.pipeline_mode<synchronous>, transform_indices = @transform_1, window_bounds = array<i64: 128, 128>}, {transform_indices = @transform_2, window_bounds = array<i64: 256, 512>}, {pipeline_mode = #tpu.pipeline_mode<synchronous>, transform_indices = @transform_3, window_bounds = array<i64: 1, 128>}, {transform_indices = @transform_4, window_bounds = array<i64: 256, 128>}]} {
    %c0_i32 = arith.constant 0 : i32
    %0 = arith.cmpi eq, %arg1, %c0_i32 : i32
    %1 = arith.extui %0 : i1 to i32
    %c0_i32_0 = arith.constant 0 : i32
    %2 = arith.cmpi ne, %1, %c0_i32_0 : i32
    scf.if %2 {
      %c0_8 = arith.constant 0 : index
      %c0_9 = arith.constant 0 : index
      %10 = vector.load %arg2[%c0_8, %c0_9] : memref<512x128xbf16, #tpu.memory_space<vmem>>, vector<512x128xbf16>
      %c0_10 = arith.constant 0 : index
      %c0_11 = arith.constant 0 : index
      %11 = vector.load %arg3[%c0_10, %c0_11] : memref<128x128xbf16, #tpu.memory_space<vmem>>, vector<128x128xbf16>
      %cst_12 = arith.constant dense<0.000000e+00> : vector<512x128xf32>
      %12 = tpu.matmul %10, %11, %cst_12 {dimension_numbers = #tpu.dot_dimension_numbers<[1], [0], [0], [1], [0, 0, 1, 1], [], []>} : vector<512x128xbf16>, vector<128x128xbf16>, vector<512x128xf32> -> vector<512x128xf32>
      %13 = arith.truncf %12 : vector<512x128xf32> to vector<512x128xbf16>
      %c0_13 = arith.constant 0 : index
      %c0_14 = arith.constant 0 : index
      %14 = vector.load %arg7[%c0_13, %c0_14] : memref<512x128xbf16, #tpu.memory_space<vmem>>, vector<512x128xbf16>
      tpu.vector_store %arg7[%c0_13, %c0_14], %13 {strides = array<i32>} : memref<512x128xbf16, #tpu.memory_space<vmem>>, vector<512x128xbf16>,
    } else {
    }
    %c0 = arith.constant 0 : index
    %c0_1 = arith.constant 0 : index
    %3 = vector.load %arg4[%c0, %c0_1] : memref<256x512xbf16, #tpu.memory_space<vmem>>, vector<256x512xbf16>
    %c0_2 = arith.constant 0 : index
    %c0_3 = arith.constant 0 : index
    %4 = vector.load %arg7[%c0_2, %c0_3] : memref<512x128xbf16, #tpu.memory_space<vmem>>, vector<512x128xbf16>
    %cst = arith.constant dense<0.000000e+00> : vector<256x128xf32>
    %5 = tpu.matmul %3, %4, %cst {dimension_numbers = #tpu.dot_dimension_numbers<[1], [0], [0], [1], [0, 0, 1, 1], [], []>} : vector<256x512xbf16>, vector<512x128xbf16>, vector<256x128xf32> -> vector<256x128xf32>
    %c0_4 = arith.constant 0 : index
    %c0_5 = arith.constant 0 : index
    %6 = vector.load %arg5[%c0_4, %c0_5] : memref<1x128xf32, #tpu.memory_space<vmem>>, vector<1x128xf32>
    %7 = vector.broadcast %6 : vector<1x128xf32> to vector<256x128xf32>
    %8 = arith.addf %5, %7 : vector<256x128xf32>
    %c0_6 = arith.constant 0 : index
    %c0_7 = arith.constant 0 : index
    %9 = vector.load %arg6[%c0_6, %c0_7] : memref<256x128xf32, #tpu.memory_space<vmem>>, vector<256x128xf32>
    tpu.vector_store %arg6[%c0_6, %c0_7], %8 {strides = array<i32>} : memref<256x128xf32, #tpu.memory_space<vmem>>, vector<256x128xf32>,
    return
  }
  func.func @transform_0(%arg0: i32, %arg1: i32) -> (i32, i32) {
    %c0_i32 = arith.constant 0 : i32
    %c0_i32_0 = arith.constant 0 : i32
    %c0_i32_1 = arith.constant 0 : i32
    return %c0_i32, %c0_i32_0 : i32, i32
  }
  func.func @transform_1(%arg0: i32, %arg1: i32) -> (i32, i32) {
    %c0_i32 = arith.constant 0 : i32
    %c0_i32_0 = arith.constant 0 : i32
    %c0_i32_1 = arith.constant 0 : i32
    return %c0_i32, %c0_i32_0 : i32, i32
  }
  func.func @transform_2(%arg0: i32, %arg1: i32) -> (i32, i32) {
    %c2_i32 = arith.constant 2 : i32
    %0 = arith.muli %arg0, %c2_i32 : i32
    %1 = arith.addi %0, %arg1 : i32
    %c1_i32 = arith.constant 1 : i32
    %2 = arith.minsi %1, %c1_i32 : i32
    %c0_i32 = arith.constant 0 : i32
    %c0_i32_0 = arith.constant 0 : i32
    return %2, %c0_i32 : i32, i32
  }
  func.func @transform_3(%arg0: i32, %arg1: i32) -> (i32, i32) {
    %c0_i32 = arith.constant 0 : i32
    %c0_i32_0 = arith.constant 0 : i32
    %c0_i32_1 = arith.constant 0 : i32
    return %c0_i32, %c0_i32_0 : i32, i32
  }
  func.func @transform_4(%arg0: i32, %arg1: i32) -> (i32, i32) {
    %c2_i32 = arith.constant 2 : i32
    %0 = arith.muli %arg0, %c2_i32 : i32
    %1 = arith.addi %0, %arg1 : i32
    %c1_i32 = arith.constant 1 : i32
    %2 = arith.minsi %1, %c1_i32 : i32
    %c0_i32 = arith.constant 0 : i32
    %c0_i32_0 = arith.constant 0 : i32
    return %2, %c0_i32 : i32, i32
  }
}

</mosaic_0001>

<llo_original>
// kernel: tpu_custom_call.1
$region0: #{tpu_custom_call.1}
  #allocation0 [shape = 'u32[]', space=smem, size = 0x4, offset = 0x4, fixed_abs, tag = 'smem constant byte address 0x4 - core index']
  #allocation1 [shape = 'u32[72,128]{1,0:T(1,128)}', space=vmem, size = 0x9000, scoped, tag = 'internal scratch']
  #allocation2 [shape = 'bf16[512,128]{1,0:T(8,128)(2,1)}', space=vmem, size = 0x20000, scoped, tag = 'scratch operand']
  %s0 = inlined_call_operand.hbm [shape: bf16[512,128], index: 0, kind: input, shape index: {}]
  %s1 = inlined_call_operand.hbm [shape: bf16[128,128], index: 1, kind: input, shape index: {}]
  %s2 = inlined_call_operand.hbm [shape: bf16[500,512], index: 2, kind: input, shape index: {}]
  %s3 = inlined_call_operand.vmem [shape: f32[1,128], index: 3, kind: input, shape index: {}]
  %s4 = inlined_call_operand.hbm [shape: f32[500,128], index: 4, kind: output, shape index: {}]
  %s5 = sld [smem:[#allocation0]]
  $region65: #{tpu_custom_call.1} parent=0
    _
  %s7 = ssub.s32 1, %s5
  %s8 = scalar_select 0, %s7, %s5
  $region1: #{tpu_custom_call.1} parent=0
    #allocation3 [shape = 'u8[131072]{0}', space=vmem, size = 0x20000, scoped, tag = 'input window, operand 0, single buffered']
    #allocation4 [shape = 's32[2]{0}', space=sflag, size = 0x8, scoped, tag = 'scoped memory for tpu_custom_call.1']
    #allocation5 [shape = 's32[2]{0}', space=sflag, size = 0x8, scoped, tag = 'scoped memory for tpu_custom_call.1']
    #allocation6 [shape = 'u8[32768]{0}', space=vmem, size = 0x8000, scoped, tag = 'input window, operand 1, single buffered']
    #allocation7 [shape = 's32[1]{0}', space=sflag, size = 0x4, scoped, tag = 'scoped memory for tpu_custom_call.1']
    #allocation8 [shape = 'u8[524288]{0}', space=vmem, size = 0x80000, scoped, tag = 'input window, operand 2']
    #allocation9 [shape = 'u8[262144]{0}', space=vmem, size = 0x40000, scoped, tag = 'output window, operand 0']
    %9 = vsyncpa [#allocation4], 0
    %10 = vsyncpa [#allocation7], 0
    %11 = vsyncpa [#allocation5], 0
    %s12 = scalar_lea.sflag [#allocation5], 1
    %13 = vsyncpa %s12, 0
    loop: start=0, step=1, limit=4
    $region2: #{tpu_custom_call.1} parent=1 // loop_pre_header
      _
    $region3: #{tpu_custom_call.1} parent=1 // loop_header
      %s15 = sphi 0, %s19
      %p16 = scmp.ge.s32.totalorder %s15, 4
      %s22 = sphi 0, %s34
      %s23 = sphi 0, %s30
      %s24 = sphi 0, %s22
      %s25 = sphi 0, %s23
      %s26 = sphi 0, %s24
      %s27 = sphi 0, %s25
      %s35 = sphi 0, %s35
      %s37 = sphi 0, %s35
      %s38 = sphi 0, %s37
      %s52 = sphi 0, %s38
      %s56 = sphi 0, %s56
      %s58 = sphi 0, %s56
      %s59 = sphi 0, %s58
      %s73 = sphi 0, %s59
      %s87 = sphi 0, %s89
      %s90 = sphi 0, %s87
      %s91 = sphi 0, %s90
      %s107 = sphi 0, %s91
      %s111 = sphi 0, %s111
      %s113 = sphi 0, %s111
      %s114 = sphi 0, %s113
      %s128 = sphi 0, %s114
      %s142 = sphi 0, %s144
      %s145 = sphi 0, %s142
      %s146 = sphi 0, %s145
      %s162 = sphi 0, %s146
    $region4: #{tpu_custom_call.1} parent=1 // loop_header_branch
      %18 = sbr.rel (%p16) target = $region8
    $region5: #{tpu_custom_call.1} parent=1 // loop_body
      %s20 = ssub.s32 %s15, 1
      %s21 = ssub.s32 %s15, 2
      %s28 = sadd.s32 1, %s23
      %p29 = scmp.ge.s32.totalorder %s28, 2
      %s30 = scalar_select %p29, 0, %s28
      %s31 = sadd.s32 1, %s22
      %s32 = scalar_select %p29, %s31, %s22
      %p33 = scmp.ge.s32.totalorder %s32, 1
      %s34 = scalar_select %p33, 0, %s32
      %s36 = sadd.s32 %s35, 1
      %p39 = scmp.eq.s32.totalorder %s15, 1
      %p40 = scmp.ne.s32.totalorder %s35, %s37
      %p41 = scmp.eq.s32.totalorder %s15, 0
      %p42 = por %p40, %p41
      %p43 = scmp.ne.s32.totalorder %s35, %s37
      %p44 = scmp.eq.s32.totalorder %s20, 1
      %p45 = por %p43, %p44
      %p46 = scmp.ne.s32.totalorder %s37, %s38
      %p47 = scmp.eq.s32.totalorder %s20, 0
      %p48 = por %p46, %p47
      %p49 = scmp.ne.s32.totalorder %s37, %s38
      %p50 = scmp.eq.s32.totalorder %s21, 1
      %p51 = por %p49, %p50
      %p53 = scmp.ne.s32.totalorder %s38, %s52
      %p54 = scmp.eq.s32.totalorder %s21, 0
      %p55 = por %p53, %p54
      %s57 = sadd.s32 %s56, 1
      %p60 = scmp.eq.s32.totalorder %s15, 1
      %p61 = scmp.ne.s32.totalorder %s56, %s58
      %p62 = scmp.eq.s32.totalorder %s15, 0
      %p63 = por %p61, %p62
      %p64 = scmp.ne.s32.totalorder %s56, %s58
      %p65 = scmp.eq.s32.totalorder %s20, 1
      %p66 = por %p64, %p65
      %p67 = scmp.ne.s32.totalorder %s58, %s59
      %p68 = scmp.eq.s32.totalorder %s20, 0
      %p69 = por %p67, %p68
      %p70 = scmp.ne.s32.totalorder %s58, %s59
      %p71 = scmp.eq.s32.totalorder %s21, 1
      %p72 = por %p70, %p71
      %p74 = scmp.ne.s32.totalorder %s59, %s73
      %p75 = scmp.eq.s32.totalorder %s21, 0
      %p76 = por %p74, %p75
      %s77 = smul.u32 %s22, 2
      %s78 = sadd.s32 %s77, %s23
      %p79 = scmp.lt.s32.totalorder %s78, 1
      %s80 = scalar_select %p79, %s78, 1
      %s81 = smul.u32 %s34, 2
      %s82 = sadd.s32 %s81, %s30
      %p83 = scmp.lt.s32.totalorder %s82, 1
      %s84 = scalar_select %p83, %s82, 1
      %s85 = ssub.s32 %s80, %s84
      %p86 = scmp.eq.s32.totalorder %s85, 0
      %s88 = sadd.s32 %s87, 1
      %s89 = scalar_select %p86, %s87, %s88
      %p92 = pneg %p86
      %p93 = scmp.eq.s32.totalorder %s15, 1
      %p94 = por %p92, %p93
      %p95 = scmp.ne.s32.totalorder %s87, %s90
      %p96 = scmp.eq.s32.totalorder %s15, 0
      %p97 = por %p95, %p96
      %p98 = scmp.ne.s32.totalorder %s87, %s90
      %p99 = scmp.eq.s32.totalorder %s20, 1
      %p100 = por %p98, %p99
      %p101 = scmp.ne.s32.totalorder %s90, %s91
      %p102 = scmp.eq.s32.totalorder %s20, 0
      %p103 = por %p101, %p102
      %p104 = scmp.ne.s32.totalorder %s90, %s91
      %p105 = scmp.eq.s32.totalorder %s21, 1
      %p106 = por %p104, %p105
      %p108 = scmp.ne.s32.totalorder %s91, %s107
      %p109 = scmp.eq.s32.totalorder %s21, 0
      %p110 = por %p108, %p109
      %s112 = sadd.s32 %s111, 1
      %p115 = scmp.eq.s32.totalorder %s15, 1
      %p116 = scmp.ne.s32.totalorder %s111, %s113
      %p117 = scmp.eq.s32.totalorder %s15, 0
      %p118 = por %p116, %p117
      %p119 = scmp.ne.s32.totalorder %s111, %s113
      %p120 = scmp.eq.s32.totalorder %s20, 1
      %p121 = por %p119, %p120
      %p122 = scmp.ne.s32.totalorder %s113, %s114
      %p123 = scmp.eq.s32.totalorder %s20, 0
      %p124 = por %p122, %p123
      %p125 = scmp.ne.s32.totalorder %s113, %s114
      %p126 = scmp.eq.s32.totalorder %s21, 1
      %p127 = por %p125, %p126
      %p129 = scmp.ne.s32.totalorder %s114, %s128
      %p130 = scmp.eq.s32.totalorder %s21, 0
      %p131 = por %p129, %p130
      %s132 = smul.u32 %s22, 2
      %s133 = sadd.s32 %s132, %s23
      %p134 = scmp.lt.s32.totalorder %s133, 1
      %s135 = scalar_select %p134, %s133, 1
      %s136 = smul.u32 %s34, 2
      %s137 = sadd.s32 %s136, %s30
      %p138 = scmp.lt.s32.totalorder %s137, 1
      %s139 = scalar_select %p138, %s137, 1
      %s140 = ssub.s32 %s135, %s139
      %p141 = scmp.eq.s32.totalorder %s140, 0
      %s143 = sadd.s32 %s142, 1
      %s144 = scalar_select %p141, %s142, %s143
      %p147 = pneg %p141
      %p148 = scmp.eq.s32.totalorder %s15, 1
      %p149 = por %p147, %p148
      %p150 = scmp.ne.s32.totalorder %s142, %s145
      %p151 = scmp.eq.s32.totalorder %s15, 0
      %p152 = por %p150, %p151
      %p153 = scmp.ne.s32.totalorder %s142, %s145
      %p154 = scmp.eq.s32.totalorder %s20, 1
      %p155 = por %p153, %p154
      %p156 = scmp.ne.s32.totalorder %s145, %s146
      %p157 = scmp.eq.s32.totalorder %s20, 0
      %p158 = por %p156, %p157
      %p159 = scmp.ne.s32.totalorder %s145, %s146
      %p160 = scmp.eq.s32.totalorder %s21, 1
      %p161 = por %p159, %p160
      %p163 = scmp.ne.s32.totalorder %s146, %s162
      %p164 = scmp.eq.s32.totalorder %s21, 0
      %p165 = por %p163, %p164
      %p166 = scmp.le.s32.totalorder 1, %s15
      %p167 = scmp.lt.s32.totalorder %s15, 3
      %p168 = pnand %p166, %p167
      %p169 = pneg %p168
      // Predicated region
      $region9: #{tpu_custom_call.1} parent=5 // pred_check
        _
      $region10: #{tpu_custom_call.1} parent=5 // pred_check_branch
        %171 = sbr.rel (%p168) target = $region12
      $region11: #{tpu_custom_call.1} parent=5 // pred_region
        %s172 = ssub.s32 %s15, 1
        // Predicated region
        $region13: #{tpu_custom_call.1} parent=11 // pred_check
          %p173 = pneg %p48
        $region14: #{tpu_custom_call.1} parent=11 // pred_check_branch
          %175 = sbr.rel (%p173) target = $region16
        $region15: #{tpu_custom_call.1} parent=11 // pred_region
          %177 = vsyncadd [#allocation4], 0
          %s178 = sshll.u32 %s0, 4
          %s179 = int_to_ptr.hbm [resolvable:$true] %s178
          %s180 = sshll.u32 [#allocation3], 4
          %s181 = int_to_ptr.vmem [resolvable:$true] %s180
          %186 = dma.hbm_to_vmem [thread:$0]  %s179, 4096, %s181, [#allocation4], 64, 64, 4
        $region16: #{tpu_custom_call.1} parent=11 // pred_fallthru
          _
        // Predicated region
        $region17: #{tpu_custom_call.1} parent=11 // pred_check
          %p187 = pneg %p69
        $region18: #{tpu_custom_call.1} parent=11 // pred_check_branch
          %189 = sbr.rel (%p187) target = $region20
        $region19: #{tpu_custom_call.1} parent=11 // pred_region
          %191 = vsyncadd [#allocation7], 0
          %s192 = sshll.u32 %s1, 4
          %s193 = int_to_ptr.hbm [resolvable:$true] %s192
          %s194 = sshll.u32 [#allocation6], 4
          %s195 = int_to_ptr.vmem [resolvable:$true] %s194
          %200 = dma.hbm_to_vmem [thread:$0]  %s193, 1024, %s195, [#allocation7], 64, 64, 4
        $region20: #{tpu_custom_call.1} parent=11 // pred_fallthru
          _
        // Predicated region
        $region21: #{tpu_custom_call.1} parent=11 // pred_check
          %p201 = pneg %p124
        $region22: #{tpu_custom_call.1} parent=11 // pred_check_branch
          %203 = sbr.rel (%p201) target = $region24
        $region23: #{tpu_custom_call.1} parent=11 // pred_region
          _
        $region24: #{tpu_custom_call.1} parent=11 // pred_fallthru
          _
      $region12: #{tpu_custom_call.1} parent=5 // pred_fallthru
        _
      %p204 = scmp.lt.s32.totalorder %s15, 2
      // Predicated region
      $region25: #{tpu_custom_call.1} parent=5 // pred_check
        %p205 = pneg %p204
      $region26: #{tpu_custom_call.1} parent=5 // pred_check_branch
        %207 = sbr.rel (%p205) target = $region28
      $region27: #{tpu_custom_call.1} parent=5 // pred_region
        // Predicated region
        $region29: #{tpu_custom_call.1} parent=27 // pred_check
          %p208 = pneg %p97
        $region30: #{tpu_custom_call.1} parent=27 // pred_check_branch
          %210 = sbr.rel (%p208) target = $region32
        $region31: #{tpu_custom_call.1} parent=27 // pred_region
          %s211 = sand.u32 %s15, 1
          %s212 = scalar_lea.sflag [#allocation4], %s211
          %s213 = sand.u32 %s87, 1
          %s214 = smul.addr %s213, 512
          %s215 = scalar_lea.vmem [#allocation8], %s214
          %s216 = smul.u32 %s22, 2
          %s217 = sadd.s32 %s216, %s23
          %p218 = scmp.lt.s32.totalorder %s217, 1
          %s219 = scalar_select %p218, %s217, 1
          %s220 = smul.u32 32, %s219
          %s221 = ssub.s32 63, %s220
          %p222 = scmp.lt.s32.totalorder %s221, 32
          %s223 = scalar_select %p222, %s221, 32
          %s224 = smul.u32 4, %s223
          %s225 = smul.u32 %s224, 4
          %s226 = ssub.s32 512, %s225
          %s227 = sshll.u32 %s226, 4
          %228 = vsyncadd %s212, %s227
          %p229 = scmp.ne.s32.totalorder 0, %s225
          %s230 = smul.addr %s220, 4
          %s231 = smul.addr %s230, 4
          %s232 = scalar_lea.hbm %s2, %s231
          %s233 = smul.u32 16, %s223
          %s234 = sshll.u32 %s232, 4
          %s235 = int_to_ptr.hbm [resolvable:$true] %s234
          %s236 = sshll.u32 %s215, 4
          %s237 = int_to_ptr.vmem [resolvable:$true] %s236
          %s238 = sshll.u32 %s233, 4
          %242 = dma.hbm_to_vmem [thread:$0]  (%p229), %s235, %s238, %s237, %s212, 256, 256, 16
        $region32: #{tpu_custom_call.1} parent=27 // pred_fallthru
          _
      $region28: #{tpu_custom_call.1} parent=5 // pred_fallthru
        _
      %p243 = scmp.le.s32.totalorder 1, %s15
      %p244 = scmp.lt.s32.totalorder %s15, 3
      %p245 = pnand %p243, %p244
      %p246 = pneg %p245
      // Predicated region
      $region33: #{tpu_custom_call.1} parent=5 // pred_check
        _
      $region34: #{tpu_custom_call.1} parent=5 // pred_check_branch
        %248 = sbr.rel (%p245) target = $region36
      $region35: #{tpu_custom_call.1} parent=5 // pred_region
        %s249 = ssub.s32 %s15, 1
        // Predicated region
        $region37: #{tpu_custom_call.1} parent=35 // pred_check
          %p250 = pneg %p48
        $region38: #{tpu_custom_call.1} parent=35 // pred_check_branch
          %252 = sbr.rel (%p250) target = $region40
        $region39: #{tpu_custom_call.1} parent=35 // pred_region
          %254 = dma.done [#allocation4], 4096
        $region40: #{tpu_custom_call.1} parent=35 // pred_fallthru
          _
        // Predicated region
        $region41: #{tpu_custom_call.1} parent=35 // pred_check
          %p255 = pneg %p69
        $region42: #{tpu_custom_call.1} parent=35 // pred_check_branch
          %257 = sbr.rel (%p255) target = $region44
        $region43: #{tpu_custom_call.1} parent=35 // pred_region
          %259 = dma.done [#allocation7], 1024
        $region44: #{tpu_custom_call.1} parent=35 // pred_fallthru
          _
        %s260 = sand.u32 %s20, 1
        %s261 = scalar_lea.sflag [#allocation4], %s260
        %s262 = sand.u32 %s90, 1
        %s263 = smul.addr %s262, 512
        %s264 = scalar_lea.vmem [#allocation8], %s263
        // Predicated region
        $region45: #{tpu_custom_call.1} parent=35 // pred_check
          %p265 = pneg %p103
        $region46: #{tpu_custom_call.1} parent=35 // pred_check_branch
          %267 = sbr.rel (%p265) target = $region48
        $region47: #{tpu_custom_call.1} parent=35 // pred_region
          %269 = dma.done %s261, 8192
        $region48: #{tpu_custom_call.1} parent=35 // pred_fallthru
          _
        %p270 = pneg %p48
        %p271 = pneg %p45
        %p272 = pneg %p69
        %p273 = pneg %p66
        %s274 = sand.u32 %s20, 1
        %s275 = scalar_lea.sflag [#allocation4], %s274
        %s276 = sand.u32 %s90, 1
        %s277 = smul.addr %s276, 512
        %s278 = scalar_lea.vmem [#allocation8], %s277
        %p279 = pneg %p103
        %p280 = pneg %p100
        %p281 = pneg %p124
        %p282 = pneg %p121
        %p283 = pneg %p158
        %p284 = pneg %p155
        %s285 = sand.u32 %s145, 1
        %s286 = scalar_lea.sflag [#allocation5], %s285
        %s287 = sand.u32 %s145, 1
        %s288 = smul.addr %s287, 256
        %s289 = scalar_lea.vmem [#allocation9], %s288
        %s290 = smul.u32 %s24, 2
        %s291 = sadd.s32 %s290, %s25
        %p292 = scmp.lt.s32.totalorder %s291, 1
        %s293 = scalar_select %p292, %s291, 1
        %s294 = smul.u32 32, %s293
        %s295 = ssub.s32 63, %s294
        %p296 = scmp.lt.s32.totalorder %s295, 32
        %s297 = scalar_select %p296, %s295, 32
        %s298 = smul.u32 4, %s297
        %s299 = smul.u32 %s298, 4
        %s300 = smul.u32 %s24, 2
        %s301 = sadd.s32 %s300, %s25
        %p302 = scmp.lt.s32.totalorder %s301, 1
        %s303 = scalar_select %p302, %s301, 1
        %s304 = smul.u32 32, %s303
        %s305 = ssub.s32 63, %s304
        %p306 = scmp.lt.s32.totalorder %s305, 32
        %s307 = scalar_select %p306, %s305, 32
        %s308 = smul.u32 8, %s307
        %p309 = scmp.eq.s32.totalorder %s25, 0
        // Predicated region
        $region49: #{tpu_custom_call.1} parent=35 // pred_check
          %p310 = pneg %p309
        $region50: #{tpu_custom_call.1} parent=35 // pred_check_branch
          %312 = sbr.rel (%p310) target = $region52
        $region51: #{tpu_custom_call.1} parent=35 // pred_region
          %v313 = vld [vmem:[#allocation3] sm:$0xf]
          %v314 = vld [vmem:[#allocation3 + $0x4] sm:$0xf]
          %v315 = vld [vmem:[#allocation3 + $0x8] sm:$0xf]
          %v316 = vld [vmem:[#allocation3 + $0xc] sm:$0xf]
          %v317 = vld [vmem:[#allocation3 + $0x10] sm:$0xf]
          %v318 = vld [vmem:[#allocation3 + $0x14] sm:$0xf]
          %v319 = vld [vmem:[#allocation3 + $0x18] sm:$0xf]
          %v320 = vld [vmem:[#allocation3 + $0x1c] sm:$0xf]
          %v321 = vld [vmem:[#allocation3 + $0x20] sm:$0xf]
          %v322 = vld [vmem:[#allocation3 + $0x24] sm:$0xf]
          %v323 = vld [vmem:[#allocation3 + $0x28] sm:$0xf]
          %v324 = vld [vmem:[#allocation3 + $0x2c] sm:$0xf]
          %v325 = vld [vmem:[#allocation3 + $0x30] sm:$0xf]
          %v326 = vld [vmem:[#allocation3 + $0x34] sm:$0xf]
          %v327 = vld [vmem:[#allocation3 + $0x38] sm:$0xf]
          %v328 = vld [vmem:[#allocation3 + $0x3c] sm:$0xf]
          %v329 = vld [vmem:[#allocation3 + $0x40] sm:$0xf]
          %v330 = vld [vmem:[#allocation3 + $0x44] sm:$0xf]
          %v331 = vld [vmem:[#allocation3 + $0x48] sm:$0xf]
          %v332 = vld [vmem:[#allocation3 + $0x4c] sm:$0xf]
          %v333 = vld [vmem:[#allocation3 + $0x50] sm:$0xf]
          %v334 = vld [vmem:[#allocation3 + $0x54] sm:$0xf]
          %v335 = vld [vmem:[#allocation3 + $0x58] sm:$0xf]
          %v336 = vld [vmem:[#allocation3 + $0x5c] sm:$0xf]
          %v337 = vld [vmem:[#allocation3 + $0x60] sm:$0xf]
          %v338 = vld [vmem:[#allocation3 + $0x64] sm:$0xf]
          %v339 = vld [vmem:[#allocation3 + $0x68] sm:$0xf]
          %v340 = vld [vmem:[#allocation3 + $0x6c] sm:$0xf]
          %v341 = vld [vmem:[#allocation3 + $0x70] sm:$0xf]
          %v342 = vld [vmem:[#allocation3 + $0x74] sm:$0xf]
          %v343 = vld [vmem:[#allocation3 + $0x78] sm:$0xf]
          %v344 = vld [vmem:[#allocation3 + $0x7c] sm:$0xf]
          %v345 = vld [vmem:[#allocation3 + $0x80] sm:$0xf]
          %v346 = vld [vmem:[#allocation3 + $0x84] sm:$0xf]
          %v347 = vld [vmem:[#allocation3 + $0x88] sm:$0xf]
          %v348 = vld [vmem:[#allocation3 + $0x8c] sm:$0xf]
          %v349 = vld [vmem:[#allocation3 + $0x90] sm:$0xf]
          %v350 = vld [vmem:[#allocation3 + $0x94] sm:$0xf]
          %v351 = vld [vmem:[#allocation3 + $0x98] sm:$0xf]
          %v352 = vld [vmem:[#allocation3 + $0x9c] sm:$0xf]
          %v353 = vld [vmem:[#allocation3 + $0xa0] sm:$0xf]
          %v354 = vld [vmem:[#allocation3 + $0xa4] sm:$0xf]
          %v355 = vld [vmem:[#allocation3 + $0xa8] sm:$0xf]
          %v356 = vld [vmem:[#allocation3 + $0xac] sm:$0xf]
          %v357 = vld [vmem:[#allocation3 + $0xb0] sm:$0xf]
          %v358 = vld [vmem:[#allocation3 + $0xb4] sm:$0xf]
          %v359 = vld [vmem:[#allocation3 + $0xb8] sm:$0xf]
          %v360 = vld [vmem:[#allocation3 + $0xbc] sm:$0xf]
          %v361 = vld [vmem:[#allocation3 + $0xc0] sm:$0xf]
          %v362 = vld [vmem:[#allocation3 + $0xc4] sm:$0xf]
          %v363 = vld [vmem:[#allocation3 + $0xc8] sm:$0xf]
          %v364 = vld [vmem:[#allocation3 + $0xcc] sm:$0xf]
          %v365 = vld [vmem:[#allocation3 + $0xd0] sm:$0xf]
          %v366 = vld [vmem:[#allocation3 + $0xd4] sm:$0xf]
          %v367 = vld [vmem:[#allocation3 + $0xd8] sm:$0xf]
          %v368 = vld [vmem:[#allocation3 + $0xdc] sm:$0xf]
          %v369 = vld [vmem:[#allocation3 + $0xe0] sm:$0xf]
          %v370 = vld [vmem:[#allocation3 + $0xe4] sm:$0xf]
          %v371 = vld [vmem:[#allocation3 + $0xe8] sm:$0xf]
          %v372 = vld [vmem:[#allocation3 + $0xec] sm:$0xf]
          %v373 = vld [vmem:[#allocation3 + $0xf0] sm:$0xf]
          %v374 = vld [vmem:[#allocation3 + $0xf4] sm:$0xf]
          %v375 = vld [vmem:[#allocation3 + $0xf8] sm:$0xf]
          %v376 = vld [vmem:[#allocation3 + $0xfc] sm:$0xf]
          %v377 = vld [vmem:[#allocation6] sm:$0xf]
          %v378 = vld [vmem:[#allocation6 + $0x4] sm:$0xf]
          %v379 = vld [vmem:[#allocation6 + $0x8] sm:$0xf]
          %v380 = vld [vmem:[#allocation6 + $0xc] sm:$0xf]
          %v381 = vld [vmem:[#allocation6 + $0x10] sm:$0xf]
          %v382 = vld [vmem:[#allocation6 + $0x14] sm:$0xf]
          %v383 = vld [vmem:[#allocation6 + $0x18] sm:$0xf]
          %v384 = vld [vmem:[#allocation6 + $0x1c] sm:$0xf]
          %v385 = vld [vmem:[#allocation6 + $0x20] sm:$0xf]
          %v386 = vld [vmem:[#allocation6 + $0x24] sm:$0xf]
          %v387 = vld [vmem:[#allocation6 + $0x28] sm:$0xf]
          %v388 = vld [vmem:[#allocation6 + $0x2c] sm:$0xf]
          %v389 = vld [vmem:[#allocation6 + $0x30] sm:$0xf]
          %v390 = vld [vmem:[#allocation6 + $0x34] sm:$0xf]
          %v391 = vld [vmem:[#allocation6 + $0x38] sm:$0xf]
          %v392 = vld [vmem:[#allocation6 + $0x3c] sm:$0xf]
          %v457 = vunpack.c.l.b16 %v313
          %v458 = vunpack.c.l.b16 %v314
          %v459 = vunpack.c.l.b16 %v315
          %v460 = vunpack.c.l.b16 %v316
          %v461 = vunpack.c.l.b16 %v317
          %v462 = vunpack.c.l.b16 %v318
          %v463 = vunpack.c.l.b16 %v319
          %v464 = vunpack.c.l.b16 %v320
          %v465 = vunpack.c.l.b16 %v321
          %v466 = vunpack.c.l.b16 %v322
          %v467 = vunpack.c.l.b16 %v323
          %v468 = vunpack.c.l.b16 %v324
          %v469 = vunpack.c.l.b16 %v325
          %v470 = vunpack.c.l.b16 %v326
          %v471 = vunpack.c.l.b16 %v327
          %v472 = vunpack.c.l.b16 %v328
          %v473 = vunpack.c.l.b16 %v329
          %v474 = vunpack.c.l.b16 %v330
          %v475 = vunpack.c.l.b16 %v331
          %v476 = vunpack.c.l.b16 %v332
          %v477 = vunpack.c.l.b16 %v333
          %v478 = vunpack.c.l.b16 %v334
          %v479 = vunpack.c.l.b16 %v335
          %v480 = vunpack.c.l.b16 %v336
          %v481 = vunpack.c.l.b16 %v337
          %v482 = vunpack.c.l.b16 %v338
          %v483 = vunpack.c.l.b16 %v339
          %v484 = vunpack.c.l.b16 %v340
          %v485 = vunpack.c.l.b16 %v341
          %v486 = vunpack.c.l.b16 %v342
          %v487 = vunpack.c.l.b16 %v343
          %v488 = vunpack.c.l.b16 %v344
          %v489 = vunpack.c.l.b16 %v345
          %v490 = vunpack.c.l.b16 %v346
          %v491 = vunpack.c.l.b16 %v347
          %v492 = vunpack.c.l.b16 %v348
          %v493 = vunpack.c.l.b16 %v349
          %v494 = vunpack.c.l.b16 %v350
          %v495 = vunpack.c.l.b16 %v351
          %v496 = vunpack.c.l.b16 %v352
          %v497 = vunpack.c.l.b16 %v353
          %v498 = vunpack.c.l.b16 %v354
          %v499 = vunpack.c.l.b16 %v355
          %v500 = vunpack.c.l.b16 %v356
          %v501 = vunpack.c.l.b16 %v357
          %v502 = vunpack.c.l.b16 %v358
          %v503 = vunpack.c.l.b16 %v359
          %v504 = vunpack.c.l.b16 %v360
          %v505 = vunpack.c.l.b16 %v361
          %v506 = vunpack.c.l.b16 %v362
          %v507 = vunpack.c.l.b16 %v363
          %v508 = vunpack.c.l.b16 %v364
          %v509 = vunpack.c.l.b16 %v365
          %v510 = vunpack.c.l.b16 %v366
          %v511 = vunpack.c.l.b16 %v367
          %v512 = vunpack.c.l.b16 %v368
          %v513 = vunpack.c.l.b16 %v369
          %v514 = vunpack.c.l.b16 %v370
          %v515 = vunpack.c.l.b16 %v371
          %v516 = vunpack.c.l.b16 %v372
          %v517 = vunpack.c.l.b16 %v373
          %v518 = vunpack.c.l.b16 %v374
          %v519 = vunpack.c.l.b16 %v375
          %v520 = vunpack.c.l.b16 %v376
          %v521 = vpack.c.b16 %v458, %v457
          %v522 = vpack.c.b16 %v460, %v459
          %v523 = vpack.c.b16 %v462, %v461
          %v524 = vpack.c.b16 %v464, %v463
          %v525 = vpack.c.b16 %v466, %v465
          %v526 = vpack.c.b16 %v468, %v467
          %v527 = vpack.c.b16 %v470, %v469
          %v528 = vpack.c.b16 %v472, %v471
          %v529 = vpack.c.b16 %v474, %v473
          %v530 = vpack.c.b16 %v476, %v475
          %v531 = vpack.c.b16 %v478, %v477
          %v532 = vpack.c.b16 %v480, %v479
          %v533 = vpack.c.b16 %v482, %v481
          %v534 = vpack.c.b16 %v484, %v483
          %v535 = vpack.c.b16 %v486, %v485
          %v536 = vpack.c.b16 %v488, %v487
          %v537 = vpack.c.b16 %v490, %v489
          %v538 = vpack.c.b16 %v492, %v491
          %v539 = vpack.c.b16 %v494, %v493
          %v540 = vpack.c.b16 %v496, %v495
          %v541 = vpack.c.b16 %v498, %v497
          %v542 = vpack.c.b16 %v500, %v499
          %v543 = vpack.c.b16 %v502, %v501
          %v544 = vpack.c.b16 %v504, %v503
          %v545 = vpack.c.b16 %v506, %v505
          %v546 = vpack.c.b16 %v508, %v507
          %v547 = vpack.c.b16 %v510, %v509
          %v548 = vpack.c.b16 %v512, %v511
          %v549 = vpack.c.b16 %v514, %v513
          %v550 = vpack.c.b16 %v516, %v515
          %v551 = vpack.c.b16 %v518, %v517
          %v552 = vpack.c.b16 %v520, %v519
          %v601 = vunpack.c.l.b16 %v377
          %v602 = vunpack.c.l.b16 %v378
          %v603 = vunpack.c.l.b16 %v379
          %v604 = vunpack.c.l.b16 %v380
          %v605 = vunpack.c.l.b16 %v381
          %v606 = vunpack.c.l.b16 %v382
          %v607 = vunpack.c.l.b16 %v383
          %v608 = vunpack.c.l.b16 %v384
          %v609 = vunpack.c.l.b16 %v385
          %v610 = vunpack.c.l.b16 %v386
          %v611 = vunpack.c.l.b16 %v387
          %v612 = vunpack.c.l.b16 %v388
          %v613 = vunpack.c.l.b16 %v389
          %v614 = vunpack.c.l.b16 %v390
          %v615 = vunpack.c.l.b16 %v391
          %v616 = vunpack.c.l.b16 %v392
          %v617 = vpack.c.b16 %v602, %v601
          %v618 = vpack.c.b16 %v604, %v603
          %v619 = vpack.c.b16 %v606, %v605
          %v620 = vpack.c.b16 %v608, %v607
          %v621 = vpack.c.b16 %v610, %v609
          %v622 = vpack.c.b16 %v612, %v611
          %v623 = vpack.c.b16 %v614, %v613
          %v624 = vpack.c.b16 %v616, %v615
          %633 = vmatpush.bf16.msra.mxu0 %v624
          %634 = vmatpush.bf16.msra.mxu0 %v623
          %635 = vmatpush.bf16.msra.mxu0 %v622
          %636 = vmatpush.bf16.msra.mxu0 %v621
          %637 = vmatpush.bf16.msra.mxu0 %v620
          %638 = vmatpush.bf16.msra.mxu0 %v619
          %639 = vmatpush.bf16.msra.mxu0 %v618
          %640 = vmatpush.bf16.msra.mxu0 %v617
          %641 = vmatmul.bf16.gmra.mxu0 %v521
          %v642 = vpop.f32.mrf.mxu0
          %v643 = vadd.f32 0.0, %v642
          %v644 = vpop.f32.mrf.mxu0
          %v645 = vadd.f32 0.0, %v644
          %646 = vmatmul.bf16.gmra.mxu0 %v522
          %v647 = vpop.f32.mrf.mxu0
          %v648 = vadd.f32 0.0, %v647
          %v649 = vpop.f32.mrf.mxu0
          %v650 = vadd.f32 0.0, %v649
          %651 = vmatmul.bf16.gmra.mxu0 %v523
          %v652 = vpop.f32.mrf.mxu0
          %v653 = vadd.f32 0.0, %v652
          %v654 = vpop.f32.mrf.mxu0
          %v655 = vadd.f32 0.0, %v654
          %656 = vmatmul.bf16.gmra.mxu0 %v524
          %v657 = vpop.f32.mrf.mxu0
          %v658 = vadd.f32 0.0, %v657
          %v659 = vpop.f32.mrf.mxu0
          %v660 = vadd.f32 0.0, %v659
          %661 = vmatmul.bf16.gmra.mxu0 %v525
          %v662 = vpop.f32.mrf.mxu0
          %v663 = vadd.f32 0.0, %v662
          %v664 = vpop.f32.mrf.mxu0
          %v665 = vadd.f32 0.0, %v664
          %666 = vmatmul.bf16.gmra.mxu0 %v526
          %v667 = vpop.f32.mrf.mxu0
          %v668 = vadd.f32 0.0, %v667
          %v669 = vpop.f32.mrf.mxu0
          %v670 = vadd.f32 0.0, %v669
          %671 = vmatmul.bf16.gmra.mxu0 %v527
          %v672 = vpop.f32.mrf.mxu0
          %v673 = vadd.f32 0.0, %v672
          %v674 = vpop.f32.mrf.mxu0
          %v675 = vadd.f32 0.0, %v674
          %676 = vmatmul.bf16.gmra.mxu0 %v528
          %v677 = vpop.f32.mrf.mxu0
          %v678 = vadd.f32 0.0, %v677
          %v679 = vpop.f32.mrf.mxu0
          %v680 = vadd.f32 0.0, %v679
          %681 = vmatmul.bf16.gmra.mxu0 %v529
          %v682 = vpop.f32.mrf.mxu0
          %v683 = vadd.f32 0.0, %v682
          %v684 = vpop.f32.mrf.mxu0
          %v685 = vadd.f32 0.0, %v684
          %686 = vmatmul.bf16.gmra.mxu0 %v530
          %v687 = vpop.f32.mrf.mxu0
          %v688 = vadd.f32 0.0, %v687
          %v689 = vpop.f32.mrf.mxu0
          %v690 = vadd.f32 0.0, %v689
          %691 = vmatmul.bf16.gmra.mxu0 %v531
          %v692 = vpop.f32.mrf.mxu0
          %v693 = vadd.f32 0.0, %v692
          %v694 = vpop.f32.mrf.mxu0
          %v695 = vadd.f32 0.0, %v694
          %696 = vmatmul.bf16.gmra.mxu0 %v532
          %v697 = vpop.f32.mrf.mxu0
          %v698 = vadd.f32 0.0, %v697
          %v699 = vpop.f32.mrf.mxu0
          %v700 = vadd.f32 0.0, %v699
          %701 = vmatmul.bf16.gmra.mxu0 %v533
          %v702 = vpop.f32.mrf.mxu0
          %v703 = vadd.f32 0.0, %v702
          %v704 = vpop.f32.mrf.mxu0
          %v705 = vadd.f32 0.0, %v704
          %706 = vmatmul.bf16.gmra.mxu0 %v534
          %v707 = vpop.f32.mrf.mxu0
          %v708 = vadd.f32 0.0, %v707
          %v709 = vpop.f32.mrf.mxu0
          %v710 = vadd.f32 0.0, %v709
          %711 = vmatmul.bf16.gmra.mxu0 %v535
          %v712 = vpop.f32.mrf.mxu0
          %v713 = vadd.f32 0.0, %v712
          %v714 = vpop.f32.mrf.mxu0
          %v715 = vadd.f32 0.0, %v714
          %716 = vmatmul.bf16.gmra.mxu0 %v536
          %v717 = vpop.f32.mrf.mxu0
          %v718 = vadd.f32 0.0, %v717
          %v719 = vpop.f32.mrf.mxu0
          %v720 = vadd.f32 0.0, %v719
          %721 = vmatmul.bf16.gmra.mxu0 %v537
          %v722 = vpop.f32.mrf.mxu0
          %v723 = vadd.f32 0.0, %v722
          %v724 = vpop.f32.mrf.mxu0
          %v725 = vadd.f32 0.0, %v724
          %726 = vmatmul.bf16.gmra.mxu0 %v538
          %v727 = vpop.f32.mrf.mxu0
          %v728 = vadd.f32 0.0, %v727
          %v729 = vpop.f32.mrf.mxu0
          %v730 = vadd.f32 0.0, %v729
          %731 = vmatmul.bf16.gmra.mxu0 %v539
          %v732 = vpop.f32.mrf.mxu0
          %v733 = vadd.f32 0.0, %v732
          %v734 = vpop.f32.mrf.mxu0
          %v735 = vadd.f32 0.0, %v734
          %736 = vmatmul.bf16.gmra.mxu0 %v540
          %v737 = vpop.f32.mrf.mxu0
          %v738 = vadd.f32 0.0, %v737
          %v739 = vpop.f32.mrf.mxu0
          %v740 = vadd.f32 0.0, %v739
          %741 = vmatmul.bf16.gmra.mxu0 %v541
          %v742 = vpop.f32.mrf.mxu0
          %v743 = vadd.f32 0.0, %v742
          %v744 = vpop.f32.mrf.mxu0
          %v745 = vadd.f32 0.0, %v744
          %746 = vmatmul.bf16.gmra.mxu0 %v542
          %v747 = vpop.f32.mrf.mxu0
          %v748 = vadd.f32 0.0, %v747
          %v749 = vpop.f32.mrf.mxu0
          %v750 = vadd.f32 0.0, %v749
          %751 = vmatmul.bf16.gmra.mxu0 %v543
          %v752 = vpop.f32.mrf.mxu0
          %v753 = vadd.f32 0.0, %v752
          %v754 = vpop.f32.mrf.mxu0
          %v755 = vadd.f32 0.0, %v754
          %756 = vmatmul.bf16.gmra.mxu0 %v544
          %v757 = vpop.f32.mrf.mxu0
          %v758 = vadd.f32 0.0, %v757
          %v759 = vpop.f32.mrf.mxu0
          %v760 = vadd.f32 0.0, %v759
          %761 = vmatmul.bf16.gmra.mxu0 %v545
          %v762 = vpop.f32.mrf.mxu0
          %v763 = vadd.f32 0.0, %v762
          %v764 = vpop.f32.mrf.mxu0
          %v765 = vadd.f32 0.0, %v764
          %766 = vmatmul.bf16.gmra.mxu0 %v546
          %v767 = vpop.f32.mrf.mxu0
          %v768 = vadd.f32 0.0, %v767
          %v769 = vpop.f32.mrf.mxu0
          %v770 = vadd.f32 0.0, %v769
          %771 = vmatmul.bf16.gmra.mxu0 %v547
          %v772 = vpop.f32.mrf.mxu0
          %v773 = vadd.f32 0.0, %v772
          %v774 = vpop.f32.mrf.mxu0
          %v775 = vadd.f32 0.0, %v774
          %776 = vmatmul.bf16.gmra.mxu0 %v548
          %v777 = vpop.f32.mrf.mxu0
          %v778 = vadd.f32 0.0, %v777
          %v779 = vpop.f32.mrf.mxu0
          %v780 = vadd.f32 0.0, %v779
          %781 = vmatmul.bf16.gmra.mxu0 %v549
          %v782 = vpop.f32.mrf.mxu0
          %v783 = vadd.f32 0.0, %v782
          %v784 = vpop.f32.mrf.mxu0
          %v785 = vadd.f32 0.0, %v784
          %786 = vmatmul.bf16.gmra.mxu0 %v550
          %v787 = vpop.f32.mrf.mxu0
          %v788 = vadd.f32 0.0, %v787
          %v789 = vpop.f32.mrf.mxu0
          %v790 = vadd.f32 0.0, %v789
          %791 = vmatmul.bf16.gmra.mxu0 %v551
          %v792 = vpop.f32.mrf.mxu0
          %v793 = vadd.f32 0.0, %v792
          %v794 = vpop.f32.mrf.mxu0
          %v795 = vadd.f32 0.0, %v794
          %796 = vmatmul.bf16.gmra.mxu0 %v552
          %v797 = vpop.f32.mrf.mxu0
          %v798 = vadd.f32 0.0, %v797
          %v799 = vpop.f32.mrf.mxu0
          %v800 = vadd.f32 0.0, %v799
          %801 = vdwg.mxu0
          %v802 = vpack.c.bf16 %v643, %v643
          %v803 = vpack.c.bf16 %v645, %v645
          %v804 = vpack.c.bf16 %v648, %v648
          %v805 = vpack.c.bf16 %v650, %v650
          %v806 = vpack.c.bf16 %v653, %v653
          %v807 = vpack.c.bf16 %v655, %v655
          %v808 = vpack.c.bf16 %v658, %v658
          %v809 = vpack.c.bf16 %v660, %v660
          %v810 = vpack.c.bf16 %v663, %v663
          %v811 = vpack.c.bf16 %v665, %v665
          %v812 = vpack.c.bf16 %v668, %v668
          %v813 = vpack.c.bf16 %v670, %v670
          %v814 = vpack.c.bf16 %v673, %v673
          %v815 = vpack.c.bf16 %v675, %v675
          %v816 = vpack.c.bf16 %v678, %v678
          %v817 = vpack.c.bf16 %v680, %v680
          %v818 = vpack.c.bf16 %v683, %v683
          %v819 = vpack.c.bf16 %v685, %v685
          %v820 = vpack.c.bf16 %v688, %v688
          %v821 = vpack.c.bf16 %v690, %v690
          %v822 = vpack.c.bf16 %v693, %v693
          %v823 = vpack.c.bf16 %v695, %v695
          %v824 = vpack.c.bf16 %v698, %v698
          %v825 = vpack.c.bf16 %v700, %v700
          %v826 = vpack.c.bf16 %v703, %v703
          %v827 = vpack.c.bf16 %v705, %v705
          %v828 = vpack.c.bf16 %v708, %v708
          %v829 = vpack.c.bf16 %v710, %v710
          %v830 = vpack.c.bf16 %v713, %v713
          %v831 = vpack.c.bf16 %v715, %v715
          %v832 = vpack.c.bf16 %v718, %v718
          %v833 = vpack.c.bf16 %v720, %v720
          %v834 = vpack.c.bf16 %v723, %v723
          %v835 = vpack.c.bf16 %v725, %v725
          %v836 = vpack.c.bf16 %v728, %v728
          %v837 = vpack.c.bf16 %v730, %v730
          %v838 = vpack.c.bf16 %v733, %v733
          %v839 = vpack.c.bf16 %v735, %v735
          %v840 = vpack.c.bf16 %v738, %v738
          %v841 = vpack.c.bf16 %v740, %v740
          %v842 = vpack.c.bf16 %v743, %v743
          %v843 = vpack.c.bf16 %v745, %v745
          %v844 = vpack.c.bf16 %v748, %v748
          %v845 = vpack.c.bf16 %v750, %v750
          %v846 = vpack.c.bf16 %v753, %v753
          %v847 = vpack.c.bf16 %v755, %v755
          %v848 = vpack.c.bf16 %v758, %v758
          %v849 = vpack.c.bf16 %v760, %v760
          %v850 = vpack.c.bf16 %v763, %v763
          %v851 = vpack.c.bf16 %v765, %v765
          %v852 = vpack.c.bf16 %v768, %v768
          %v853 = vpack.c.bf16 %v770, %v770
          %v854 = vpack.c.bf16 %v773, %v773
          %v855 = vpack.c.bf16 %v775, %v775
          %v856 = vpack.c.bf16 %v778, %v778
          %v857 = vpack.c.bf16 %v780, %v780
          %v858 = vpack.c.bf16 %v783, %v783
          %v859 = vpack.c.bf16 %v785, %v785
          %v860 = vpack.c.bf16 %v788, %v788
          %v861 = vpack.c.bf16 %v790, %v790
          %v862 = vpack.c.bf16 %v793, %v793
          %v863 = vpack.c.bf16 %v795, %v795
          %v864 = vpack.c.bf16 %v798, %v798
          %v865 = vpack.c.bf16 %v800, %v800
          %866 = vst [vmem:[#allocation2] sm:$0xf] %v802
          %867 = vst [vmem:[#allocation2 + $0x4] sm:$0xf] %v803
          %868 = vst [vmem:[#allocation2 + $0x8] sm:$0xf] %v804
          %869 = vst [vmem:[#allocation2 + $0xc] sm:$0xf] %v805
          %870 = vst [vmem:[#allocation2 + $0x10] sm:$0xf] %v806
          %871 = vst [vmem:[#allocation2 + $0x14] sm:$0xf] %v807
          %872 = vst [vmem:[#allocation2 + $0x18] sm:$0xf] %v808
          %873 = vst [vmem:[#allocation2 + $0x1c] sm:$0xf] %v809
          %874 = vst [vmem:[#allocation2 + $0x20] sm:$0xf] %v810
          %875 = vst [vmem:[#allocation2 + $0x24] sm:$0xf] %v811
          %876 = vst [vmem:[#allocation2 + $0x28] sm:$0xf] %v812
          %877 = vst [vmem:[#allocation2 + $0x2c] sm:$0xf] %v813
          %878 = vst [vmem:[#allocation2 + $0x30] sm:$0xf] %v814
          %879 = vst [vmem:[#allocation2 + $0x34] sm:$0xf] %v815
          %880 = vst [vmem:[#allocation2 + $0x38] sm:$0xf] %v816
          %881 = vst [vmem:[#allocation2 + $0x3c] sm:$0xf] %v817
          %882 = vst [vmem:[#allocation2 + $0x40] sm:$0xf] %v818
          %883 = vst [vmem:[#allocation2 + $0x44] sm:$0xf] %v819
          %884 = vst [vmem:[#allocation2 + $0x48] sm:$0xf] %v820
          %885 = vst [vmem:[#allocation2 + $0x4c] sm:$0xf] %v821
          %886 = vst [vmem:[#allocation2 + $0x50] sm:$0xf] %v822
          %887 = vst [vmem:[#allocation2 + $0x54] sm:$0xf] %v823
          %888 = vst [vmem:[#allocation2 + $0x58] sm:$0xf] %v824
          %889 = vst [vmem:[#allocation2 + $0x5c] sm:$0xf] %v825
          %890 = vst [vmem:[#allocation2 + $0x60] sm:$0xf] %v826
          %891 = vst [vmem:[#allocation2 + $0x64] sm:$0xf] %v827
          %892 = vst [vmem:[#allocation2 + $0x68] sm:$0xf] %v828
          %893 = vst [vmem:[#allocation2 + $0x6c] sm:$0xf] %v829
          %894 = vst [vmem:[#allocation2 + $0x70] sm:$0xf] %v830
          %895 = vst [vmem:[#allocation2 + $0x74] sm:$0xf] %v831
          %896 = vst [vmem:[#allocation2 + $0x78] sm:$0xf] %v832
          %897 = vst [vmem:[#allocation2 + $0x7c] sm:$0xf] %v833
          %898 = vst [vmem:[#allocation2 + $0x80] sm:$0xf] %v834
          %899 = vst [vmem:[#allocation2 + $0x84] sm:$0xf] %v835
          %900 = vst [vmem:[#allocation2 + $0x88] sm:$0xf] %v836
          %901 = vst [vmem:[#allocation2 + $0x8c] sm:$0xf] %v837
          %902 = vst [vmem:[#allocation2 + $0x90] sm:$0xf] %v838
          %903 = vst [vmem:[#allocation2 + $0x94] sm:$0xf] %v839
          %904 = vst [vmem:[#allocation2 + $0x98] sm:$0xf] %v840
          %905 = vst [vmem:[#allocation2 + $0x9c] sm:$0xf] %v841
          %906 = vst [vmem:[#allocation2 + $0xa0] sm:$0xf] %v842
          %907 = vst [vmem:[#allocation2 + $0xa4] sm:$0xf] %v843
          %908 = vst [vmem:[#allocation2 + $0xa8] sm:$0xf] %v844
          %909 = vst [vmem:[#allocation2 + $0xac] sm:$0xf] %v845
          %910 = vst [vmem:[#allocation2 + $0xb0] sm:$0xf] %v846
          %911 = vst [vmem:[#allocation2 + $0xb4] sm:$0xf] %v847
          %912 = vst [vmem:[#allocation2 + $0xb8] sm:$0xf] %v848
          %913 = vst [vmem:[#allocation2 + $0xbc] sm:$0xf] %v849
          %914 = vst [vmem:[#allocation2 + $0xc0] sm:$0xf] %v850
          %915 = vst [vmem:[#allocation2 + $0xc4] sm:$0xf] %v851
          %916 = vst [vmem:[#allocation2 + $0xc8] sm:$0xf] %v852
          %917 = vst [vmem:[#allocation2 + $0xcc] sm:$0xf] %v853
          %918 = vst [vmem:[#allocation2 + $0xd0] sm:$0xf] %v854
          %919 = vst [vmem:[#allocation2 + $0xd4] sm:$0xf] %v855
          %920 = vst [vmem:[#allocation2 + $0xd8] sm:$0xf] %v856
          %921 = vst [vmem:[#allocation2 + $0xdc] sm:$0xf] %v857
          %922 = vst [vmem:[#allocation2 + $0xe0] sm:$0xf] %v858
          %923 = vst [vmem:[#allocation2 + $0xe4] sm:$0xf] %v859
          %924 = vst [vmem:[#allocation2 + $0xe8] sm:$0xf] %v860
          %925 = vst [vmem:[#allocation2 + $0xec] sm:$0xf] %v861
          %926 = vst [vmem:[#allocation2 + $0xf0] sm:$0xf] %v862
          %927 = vst [vmem:[#allocation2 + $0xf4] sm:$0xf] %v863
          %928 = vst [vmem:[#allocation2 + $0xf8] sm:$0xf] %v864
          %929 = vst [vmem:[#allocation2 + $0xfc] sm:$0xf] %v865
        $region52: #{tpu_custom_call.1} parent=35 // pred_fallthru
          _
        %v930 = vld [vmem:[%s264] sm:$0xff]
        %v931 = vld [vmem:[%s264 + $0x8] sm:$0xff]
        %v932 = vld [vmem:[%s264 + $0x10] sm:$0xff]
        %v933 = vld [vmem:[%s264 + $0x18] sm:$0xff]
        %v934 = vld [vmem:[%s264 + $0x20] sm:$0xff]
        %v935 = vld [vmem:[%s264 + $0x28] sm:$0xff]
        %v936 = vld [vmem:[%s264 + $0x30] sm:$0xff]
        %v937 = vld [vmem:[%s264 + $0x38] sm:$0xff]
        %v938 = vld [vmem:[%s264 + $0x40] sm:$0xff]
        %v939 = vld [vmem:[%s264 + $0x48] sm:$0xff]
        %v940 = vld [vmem:[%s264 + $0x50] sm:$0xff]
        %v941 = vld [vmem:[%s264 + $0x58] sm:$0xff]
        %v942 = vld [vmem:[%s264 + $0x60] sm:$0xff]
        %v943 = vld [vmem:[%s264 + $0x68] sm:$0xff]
        %v944 = vld [vmem:[%s264 + $0x70] sm:$0xff]
        %v945 = vld [vmem:[%s264 + $0x78] sm:$0xff]
        %v946 = vld [vmem:[%s264 + $0x80] sm:$0xff]
        %v947 = vld [vmem:[%s264 + $0x88] sm:$0xff]
        %v948 = vld [vmem:[%s264 + $0x90] sm:$0xff]
        %v949 = vld [vmem:[%s264 + $0x98] sm:$0xff]
        %v950 = vld [vmem:[%s264 + $0xa0] sm:$0xff]
        %v951 = vld [vmem:[%s264 + $0xa8] sm:$0xff]
        %v952 = vld [vmem:[%s264 + $0xb0] sm:$0xff]
        %v953 = vld [vmem:[%s264 + $0xb8] sm:$0xff]
        %v954 = vld [vmem:[%s264 + $0xc0] sm:$0xff]
        %v955 = vld [vmem:[%s264 + $0xc8] sm:$0xff]
        %v956 = vld [vmem:[%s264 + $0xd0] sm:$0xff]
        %v957 = vld [vmem:[%s264 + $0xd8] sm:$0xff]
        %v958 = vld [vmem:[%s264 + $0xe0] sm:$0xff]
        %v959 = vld [vmem:[%s264 + $0xe8] sm:$0xff]
        %v960 = vld [vmem:[%s264 + $0xf0] sm:$0xff]
        %v961 = vld [vmem:[%s264 + $0xf8] sm:$0xff]
        %v962 = vld [vmem:[%s264 + $0x100] sm:$0xff]
        %v963 = vld [vmem:[%s264 + $0x108] sm:$0xff]
        %v964 = vld [vmem:[%s264 + $0x110] sm:$0xff]
        %v965 = vld [vmem:[%s264 + $0x118] sm:$0xff]
        %v966 = vld [vmem:[%s264 + $0x120] sm:$0xff]
        %v967 = vld [vmem:[%s264 + $0x128] sm:$0xff]
        %v968 = vld [vmem:[%s264 + $0x130] sm:$0xff]
        %v969 = vld [vmem:[%s264 + $0x138] sm:$0xff]
        %v970 = vld [vmem:[%s264 + $0x140] sm:$0xff]
        %v971 = vld [vmem:[%s264 + $0x148] sm:$0xff]
        %v972 = vld [vmem:[%s264 + $0x150] sm:$0xff]
        %v973 = vld [vmem:[%s264 + $0x158] sm:$0xff]
        %v974 = vld [vmem:[%s264 + $0x160] sm:$0xff]
        %v975 = vld [vmem:[%s264 + $0x168] sm:$0xff]
        %v976 = vld [vmem:[%s264 + $0x170] sm:$0xff]
        %v977 = vld [vmem:[%s264 + $0x178] sm:$0xff]
        %v978 = vld [vmem:[%s264 + $0x180] sm:$0xff]
        %v979 = vld [vmem:[%s264 + $0x188] sm:$0xff]
        %v980 = vld [vmem:[%s264 + $0x190] sm:$0xff]
        %v981 = vld [vmem:[%s264 + $0x198] sm:$0xff]
        %v982 = vld [vmem:[%s264 + $0x1a0] sm:$0xff]
        %v983 = vld [vmem:[%s264 + $0x1a8] sm:$0xff]
        %v984 = vld [vmem:[%s264 + $0x1b0] sm:$0xff]
        %v985 = vld [vmem:[%s264 + $0x1b8] sm:$0xff]
        %v986 = vld [vmem:[%s264 + $0x1c0] sm:$0xff]
        %v987 = vld [vmem:[%s264 + $0x1c8] sm:$0xff]
        %v988 = vld [vmem:[%s264 + $0x1d0] sm:$0xff]
        %v989 = vld [vmem:[%s264 + $0x1d8] sm:$0xff]
        %v990 = vld [vmem:[%s264 + $0x1e0] sm:$0xff]
        %v991 = vld [vmem:[%s264 + $0x1e8] sm:$0xff]
        %v992 = vld [vmem:[%s264 + $0x1f0] sm:$0xff]
        %v993 = vld [vmem:[%s264 + $0x1f8] sm:$0xff]
        %v994 = vld [vmem:[#allocation2] sm:$0xf]
        %v995 = vld [vmem:[#allocation2 + $0x4] sm:$0xf]
        %v996 = vld [vmem:[#allocation2 + $0x8] sm:$0xf]
        %v997 = vld [vmem:[#allocation2 + $0xc] sm:$0xf]
        %v998 = vld [vmem:[#allocation2 + $0x10] sm:$0xf]
        %v999 = vld [vmem:[#allocation2 + $0x14] sm:$0xf]
        %v1000 = vld [vmem:[#allocation2 + $0x18] sm:$0xf]
        %v1001 = vld [vmem:[#allocation2 + $0x1c] sm:$0xf]
        %v1002 = vld [vmem:[#allocation2 + $0x20] sm:$0xf]
        %v1003 = vld [vmem:[#allocation2 + $0x24] sm:$0xf]
        %v1004 = vld [vmem:[#allocation2 + $0x28] sm:$0xf]
        %v1005 = vld [vmem:[#allocation2 + $0x2c] sm:$0xf]
        %v1006 = vld [vmem:[#allocation2 + $0x30] sm:$0xf]
        %v1007 = vld [vmem:[#allocation2 + $0x34] sm:$0xf]
        %v1008 = vld [vmem:[#allocation2 + $0x38] sm:$0xf]
        %v1009 = vld [vmem:[#allocation2 + $0x3c] sm:$0xf]
        %v1010 = vld [vmem:[#allocation2 + $0x40] sm:$0xf]
        %v1011 = vld [vmem:[#allocation2 + $0x44] sm:$0xf]
        %v1012 = vld [vmem:[#allocation2 + $0x48] sm:$0xf]
        %v1013 = vld [vmem:[#allocation2 + $0x4c] sm:$0xf]
        %v1014 = vld [vmem:[#allocation2 + $0x50] sm:$0xf]
        %v1015 = vld [vmem:[#allocation2 + $0x54] sm:$0xf]
        %v1016 = vld [vmem:[#allocation2 + $0x58] sm:$0xf]
        %v1017 = vld [vmem:[#allocation2 + $0x5c] sm:$0xf]
        %v1018 = vld [vmem:[#allocation2 + $0x60] sm:$0xf]
        %v1019 = vld [vmem:[#allocation2 + $0x64] sm:$0xf]
        %v1020 = vld [vmem:[#allocation2 + $0x68] sm:$0xf]
        %v1021 = vld [vmem:[#allocation2 + $0x6c] sm:$0xf]
        %v1022 = vld [vmem:[#allocation2 + $0x70] sm:$0xf]
        %v1023 = vld [vmem:[#allocation2 + $0x74] sm:$0xf]
        %v1024 = vld [vmem:[#allocation2 + $0x78] sm:$0xf]
        %v1025 = vld [vmem:[#allocation2 + $0x7c] sm:$0xf]
        %v1026 = vld [vmem:[#allocation2 + $0x80] sm:$0xf]
        %v1027 = vld [vmem:[#allocation2 + $0x84] sm:$0xf]
        %v1028 = vld [vmem:[#allocation2 + $0x88] sm:$0xf]
        %v1029 = vld [vmem:[#allocation2 + $0x8c] sm:$0xf]
        %v1030 = vld [vmem:[#allocation2 + $0x90] sm:$0xf]
        %v1031 = vld [vmem:[#allocation2 + $0x94] sm:$0xf]
        %v1032 = vld [vmem:[#allocation2 + $0x98] sm:$0xf]
        %v1033 = vld [vmem:[#allocation2 + $0x9c] sm:$0xf]
        %v1034 = vld [vmem:[#allocation2 + $0xa0] sm:$0xf]
        %v1035 = vld [vmem:[#allocation2 + $0xa4] sm:$0xf]
        %v1036 = vld [vmem:[#allocation2 + $0xa8] sm:$0xf]
        %v1037 = vld [vmem:[#allocation2 + $0xac] sm:$0xf]
        %v1038 = vld [vmem:[#allocation2 + $0xb0] sm:$0xf]
        %v1039 = vld [vmem:[#allocation2 + $0xb4] sm:$0xf]
        %v1040 = vld [vmem:[#allocation2 + $0xb8] sm:$0xf]
        %v1041 = vld [vmem:[#allocation2 + $0xbc] sm:$0xf]
        %v1042 = vld [vmem:[#allocation2 + $0xc0] sm:$0xf]
        %v1043 = vld [vmem:[#allocation2 + $0xc4] sm:$0xf]
        %v1044 = vld [vmem:[#allocation2 + $0xc8] sm:$0xf]
        %v1045 = vld [vmem:[#allocation2 + $0xcc] sm:$0xf]
        %v1046 = vld [vmem:[#allocation2 + $0xd0] sm:$0xf]
        %v1047 = vld [vmem:[#allocation2 + $0xd4] sm:$0xf]
        %v1048 = vld [vmem:[#allocation2 + $0xd8] sm:$0xf]
        %v1049 = vld [vmem:[#allocation2 + $0xdc] sm:$0xf]
        %v1050 = vld [vmem:[#allocation2 + $0xe0] sm:$0xf]
        %v1051 = vld [vmem:[#allocation2 + $0xe4] sm:$0xf]
        %v1052 = vld [vmem:[#allocation2 + $0xe8] sm:$0xf]
        %v1053 = vld [vmem:[#allocation2 + $0xec] sm:$0xf]
        %v1054 = vld [vmem:[#allocation2 + $0xf0] sm:$0xf]
        %v1055 = vld [vmem:[#allocation2 + $0xf4] sm:$0xf]
        %v1056 = vld [vmem:[#allocation2 + $0xf8] sm:$0xf]
        %v1057 = vld [vmem:[#allocation2 + $0xfc] sm:$0xf]
        %v1058 = vld [vmem:[%s3] sm:$0x1]
        %v1060 = vperm.slane %v1058, 0
        %v1126 = vunpack.c.l.b16 %v930
        %v1127 = vunpack.c.h.b16 %v930
        %v1128 = vunpack.c.l.b16 %v931
        %v1129 = vunpack.c.h.b16 %v931
        %v1130 = vunpack.c.l.b16 %v932
        %v1131 = vunpack.c.h.b16 %v932
        %v1132 = vunpack.c.l.b16 %v933
        %v1133 = vunpack.c.h.b16 %v933
        %v1134 = vunpack.c.l.b16 %v934
        %v1135 = vunpack.c.h.b16 %v934
        %v1136 = vunpack.c.l.b16 %v935
        %v1137 = vunpack.c.h.b16 %v935
        %v1138 = vunpack.c.l.b16 %v936
        %v1139 = vunpack.c.h.b16 %v936
        %v1140 = vunpack.c.l.b16 %v937
        %v1141 = vunpack.c.h.b16 %v937
        %v1142 = vunpack.c.l.b16 %v938
        %v1143 = vunpack.c.h.b16 %v938
        %v1144 = vunpack.c.l.b16 %v939
        %v1145 = vunpack.c.h.b16 %v939
        %v1146 = vunpack.c.l.b16 %v940
        %v1147 = vunpack.c.h.b16 %v940
        %v1148 = vunpack.c.l.b16 %v941
        %v1149 = vunpack.c.h.b16 %v941
        %v1150 = vunpack.c.l.b16 %v942
        %v1151 = vunpack.c.h.b16 %v942
        %v1152 = vunpack.c.l.b16 %v943
        %v1153 = vunpack.c.h.b16 %v943
        %v1154 = vunpack.c.l.b16 %v944
        %v1155 = vunpack.c.h.b16 %v944
        %v1156 = vunpack.c.l.b16 %v945
        %v1157 = vunpack.c.h.b16 %v945
        %v1158 = vunpack.c.l.b16 %v946
        %v1159 = vunpack.c.h.b16 %v946
        %v1160 = vunpack.c.l.b16 %v947
        %v1161 = vunpack.c.h.b16 %v947
        %v1162 = vunpack.c.l.b16 %v948
        %v1163 = vunpack.c.h.b16 %v948
        %v1164 = vunpack.c.l.b16 %v949
        %v1165 = vunpack.c.h.b16 %v949
        %v1166 = vunpack.c.l.b16 %v950
        %v1167 = vunpack.c.h.b16 %v950
        %v1168 = vunpack.c.l.b16 %v951
        %v1169 = vunpack.c.h.b16 %v951
        %v1170 = vunpack.c.l.b16 %v952
        %v1171 = vunpack.c.h.b16 %v952
        %v1172 = vunpack.c.l.b16 %v953
        %v1173 = vunpack.c.h.b16 %v953
        %v1174 = vunpack.c.l.b16 %v954
        %v1175 = vunpack.c.h.b16 %v954
        %v1176 = vunpack.c.l.b16 %v955
        %v1177 = vunpack.c.h.b16 %v955
        %v1178 = vunpack.c.l.b16 %v956
        %v1179 = vunpack.c.h.b16 %v956
        %v1180 = vunpack.c.l.b16 %v957
        %v1181 = vunpack.c.h.b16 %v957
        %v1182 = vunpack.c.l.b16 %v958
        %v1183 = vunpack.c.h.b16 %v958
        %v1184 = vunpack.c.l.b16 %v959
        %v1185 = vunpack.c.h.b16 %v959
        %v1186 = vunpack.c.l.b16 %v960
        %v1187 = vunpack.c.h.b16 %v960
        %v1188 = vunpack.c.l.b16 %v961
        %v1189 = vunpack.c.h.b16 %v961
        %v1190 = vunpack.c.l.b16 %v962
        %v1191 = vunpack.c.h.b16 %v962
        %v1192 = vunpack.c.l.b16 %v963
        %v1193 = vunpack.c.h.b16 %v963
        %v1194 = vunpack.c.l.b16 %v964
        %v1195 = vunpack.c.h.b16 %v964
        %v1196 = vunpack.c.l.b16 %v965
        %v1197 = vunpack.c.h.b16 %v965
        %v1198 = vunpack.c.l.b16 %v966
        %v1199 = vunpack.c.h.b16 %v966
        %v1200 = vunpack.c.l.b16 %v967
        %v1201 = vunpack.c.h.b16 %v967
        %v1202 = vunpack.c.l.b16 %v968
        %v1203 = vunpack.c.h.b16 %v968
        %v1204 = vunpack.c.l.b16 %v969
        %v1205 = vunpack.c.h.b16 %v969
        %v1206 = vunpack.c.l.b16 %v970
        %v1207 = vunpack.c.h.b16 %v970
        %v1208 = vunpack.c.l.b16 %v971
        %v1209 = vunpack.c.h.b16 %v971
        %v1210 = vunpack.c.l.b16 %v972
        %v1211 = vunpack.c.h.b16 %v972
        %v1212 = vunpack.c.l.b16 %v973
        %v1213 = vunpack.c.h.b16 %v973
        %v1214 = vunpack.c.l.b16 %v974
        %v1215 = vunpack.c.h.b16 %v974
        %v1216 = vunpack.c.l.b16 %v975
        %v1217 = vunpack.c.h.b16 %v975
        %v1218 = vunpack.c.l.b16 %v976
        %v1219 = vunpack.c.h.b16 %v976
        %v1220 = vunpack.c.l.b16 %v977
        %v1221 = vunpack.c.h.b16 %v977
        %v1222 = vunpack.c.l.b16 %v978
        %v1223 = vunpack.c.h.b16 %v978
        %v1224 = vunpack.c.l.b16 %v979
        %v1225 = vunpack.c.h.b16 %v979
        %v1226 = vunpack.c.l.b16 %v980
        %v1227 = vunpack.c.h.b16 %v980
        %v1228 = vunpack.c.l.b16 %v981
        %v1229 = vunpack.c.h.b16 %v981
        %v1230 = vunpack.c.l.b16 %v982
        %v1231 = vunpack.c.h.b16 %v982
        %v1232 = vunpack.c.l.b16 %v983
        %v1233 = vunpack.c.h.b16 %v983
        %v1234 = vunpack.c.l.b16 %v984
        %v1235 = vunpack.c.h.b16 %v984
        %v1236 = vunpack.c.l.b16 %v985
        %v1237 = vunpack.c.h.b16 %v985
        %v1238 = vunpack.c.l.b16 %v986
        %v1239 = vunpack.c.h.b16 %v986
        %v1240 = vunpack.c.l.b16 %v987
        %v1241 = vunpack.c.h.b16 %v987
        %v1242 = vunpack.c.l.b16 %v988
        %v1243 = vunpack.c.h.b16 %v988
        %v1244 = vunpack.c.l.b16 %v989
        %v1245 = vunpack.c.h.b16 %v989
        %v1246 = vunpack.c.l.b16 %v990
        %v1247 = vunpack.c.h.b16 %v990
        %v1248 = vunpack.c.l.b16 %v991
        %v1249 = vunpack.c.h.b16 %v991
        %v1250 = vunpack.c.l.b16 %v992
        %v1251 = vunpack.c.h.b16 %v992
        %v1252 = vunpack.c.l.b16 %v993
        %v1253 = vunpack.c.h.b16 %v993
        %v1254 = vpack.c.b16 %v1130, %v1126
        %v1255 = vpack.c.b16 %v1131, %v1127
        %v1256 = vpack.c.b16 %v1132, %v1128
        %v1257 = vpack.c.b16 %v1133, %v1129
        %v1258 = vpack.c.b16 %v1138, %v1134
        %v1259 = vpack.c.b16 %v1139, %v1135
        %v1260 = vpack.c.b16 %v1140, %v1136
        %v1261 = vpack.c.b16 %v1141, %v1137
        %v1262 = vpack.c.b16 %v1146, %v1142
        %v1263 = vpack.c.b16 %v1147, %v1143
        %v1264 = vpack.c.b16 %v1148, %v1144
        %v1265 = vpack.c.b16 %v1149, %v1145
        %v1266 = vpack.c.b16 %v1154, %v1150
        %v1267 = vpack.c.b16 %v1155, %v1151
        %v1268 = vpack.c.b16 %v1156, %v1152
        %v1269 = vpack.c.b16 %v1157, %v1153
        %v1270 = vpack.c.b16 %v1162, %v1158
        %v1271 = vpack.c.b16 %v1163, %v1159
        %v1272 = vpack.c.b16 %v1164, %v1160
        %v1273 = vpack.c.b16 %v1165, %v1161
        %v1274 = vpack.c.b16 %v1170, %v1166
        %v1275 = vpack.c.b16 %v1171, %v1167
        %v1276 = vpack.c.b16 %v1172, %v1168
        %v1277 = vpack.c.b16 %v1173, %v1169
        %v1278 = vpack.c.b16 %v1178, %v1174
        %v1279 = vpack.c.b16 %v1179, %v1175
        %v1280 = vpack.c.b16 %v1180, %v1176
        %v1281 = vpack.c.b16 %v1181, %v1177
        %v1282 = vpack.c.b16 %v1186, %v1182
        %v1283 = vpack.c.b16 %v1187, %v1183
        %v1284 = vpack.c.b16 %v1188, %v1184
        %v1285 = vpack.c.b16 %v1189, %v1185
        %v1286 = vpack.c.b16 %v1194, %v1190
        %v1287 = vpack.c.b16 %v1195, %v1191
        %v1288 = vpack.c.b16 %v1196, %v1192
        %v1289 = vpack.c.b16 %v1197, %v1193
        %v1290 = vpack.c.b16 %v1202, %v1198
        %v1291 = vpack.c.b16 %v1203, %v1199
        %v1292 = vpack.c.b16 %v1204, %v1200
        %v1293 = vpack.c.b16 %v1205, %v1201
        %v1294 = vpack.c.b16 %v1210, %v1206
        %v1295 = vpack.c.b16 %v1211, %v1207
        %v1296 = vpack.c.b16 %v1212, %v1208
        %v1297 = vpack.c.b16 %v1213, %v1209
        %v1298 = vpack.c.b16 %v1218, %v1214
        %v1299 = vpack.c.b16 %v1219, %v1215
        %v1300 = vpack.c.b16 %v1220, %v1216
        %v1301 = vpack.c.b16 %v1221, %v1217
        %v1302 = vpack.c.b16 %v1226, %v1222
        %v1303 = vpack.c.b16 %v1227, %v1223
        %v1304 = vpack.c.b16 %v1228, %v1224
        %v1305 = vpack.c.b16 %v1229, %v1225
        %v1306 = vpack.c.b16 %v1234, %v1230
        %v1307 = vpack.c.b16 %v1235, %v1231
        %v1308 = vpack.c.b16 %v1236, %v1232
        %v1309 = vpack.c.b16 %v1237, %v1233
        %v1310 = vpack.c.b16 %v1242, %v1238
        %v1311 = vpack.c.b16 %v1243, %v1239
        %v1312 = vpack.c.b16 %v1244, %v1240
        %v1313 = vpack.c.b16 %v1245, %v1241
        %v1314 = vpack.c.b16 %v1250, %v1246
        %v1315 = vpack.c.b16 %v1251, %v1247
        %v1316 = vpack.c.b16 %v1252, %v1248
        %v1317 = vpack.c.b16 %v1253, %v1249
        %v1446 = vunpack.c.l.b16 %v994
        %v1447 = vunpack.c.l.b16 %v995
        %v1448 = vunpack.c.l.b16 %v996
        %v1449 = vunpack.c.l.b16 %v997
        %v1450 = vunpack.c.l.b16 %v998
        %v1451 = vunpack.c.l.b16 %v999
        %v1452 = vunpack.c.l.b16 %v1000
        %v1453 = vunpack.c.l.b16 %v1001
        %v1454 = vunpack.c.l.b16 %v1002
        %v1455 = vunpack.c.l.b16 %v1003
        %v1456 = vunpack.c.l.b16 %v1004
        %v1457 = vunpack.c.l.b16 %v1005
        %v1458 = vunpack.c.l.b16 %v1006
        %v1459 = vunpack.c.l.b16 %v1007
        %v1460 = vunpack.c.l.b16 %v1008
        %v1461 = vunpack.c.l.b16 %v1009
        %v1462 = vunpack.c.l.b16 %v1010
        %v1463 = vunpack.c.l.b16 %v1011
        %v1464 = vunpack.c.l.b16 %v1012
        %v1465 = vunpack.c.l.b16 %v1013
        %v1466 = vunpack.c.l.b16 %v1014
        %v1467 = vunpack.c.l.b16 %v1015
        %v1468 = vunpack.c.l.b16 %v1016
        %v1469 = vunpack.c.l.b16 %v1017
        %v1470 = vunpack.c.l.b16 %v1018
        %v1471 = vunpack.c.l.b16 %v1019
        %v1472 = vunpack.c.l.b16 %v1020
        %v1473 = vunpack.c.l.b16 %v1021
        %v1474 = vunpack.c.l.b16 %v1022
        %v1475 = vunpack.c.l.b16 %v1023
        %v1476 = vunpack.c.l.b16 %v1024
        %v1477 = vunpack.c.l.b16 %v1025
        %v1478 = vunpack.c.l.b16 %v1026
        %v1479 = vunpack.c.l.b16 %v1027
        %v1480 = vunpack.c.l.b16 %v1028
        %v1481 = vunpack.c.l.b16 %v1029
        %v1482 = vunpack.c.l.b16 %v1030
        %v1483 = vunpack.c.l.b16 %v1031
        %v1484 = vunpack.c.l.b16 %v1032
        %v1485 = vunpack.c.l.b16 %v1033
        %v1486 = vunpack.c.l.b16 %v1034
        %v1487 = vunpack.c.l.b16 %v1035
        %v1488 = vunpack.c.l.b16 %v1036
        %v1489 = vunpack.c.l.b16 %v1037
        %v1490 = vunpack.c.l.b16 %v1038
        %v1491 = vunpack.c.l.b16 %v1039
        %v1492 = vunpack.c.l.b16 %v1040
        %v1493 = vunpack.c.l.b16 %v1041
        %v1494 = vunpack.c.l.b16 %v1042
        %v1495 = vunpack.c.l.b16 %v1043
        %v1496 = vunpack.c.l.b16 %v1044
        %v1497 = vunpack.c.l.b16 %v1045
        %v1498 = vunpack.c.l.b16 %v1046
        %v1499 = vunpack.c.l.b16 %v1047
        %v1500 = vunpack.c.l.b16 %v1048
        %v1501 = vunpack.c.l.b16 %v1049
        %v1502 = vunpack.c.l.b16 %v1050
        %v1503 = vunpack.c.l.b16 %v1051
        %v1504 = vunpack.c.l.b16 %v1052
        %v1505 = vunpack.c.l.b16 %v1053
        %v1506 = vunpack.c.l.b16 %v1054
        %v1507 = vunpack.c.l.b16 %v1055
        %v1508 = vunpack.c.l.b16 %v1056
        %v1509 = vunpack.c.l.b16 %v1057
        %v1510 = vpack.c.b16 %v1447, %v1446
        %v1511 = vpack.c.b16 %v1449, %v1448
        %v1512 = vpack.c.b16 %v1451, %v1450
        %v1513 = vpack.c.b16 %v1453, %v1452
        %v1514 = vpack.c.b16 %v1455, %v1454
        %v1515 = vpack.c.b16 %v1457, %v1456
        %v1516 = vpack.c.b16 %v1459, %v1458
        %v1517 = vpack.c.b16 %v1461, %v1460
        %v1518 = vpack.c.b16 %v1463, %v1462
        %v1519 = vpack.c.b16 %v1465, %v1464
        %v1520 = vpack.c.b16 %v1467, %v1466
        %v1521 = vpack.c.b16 %v1469, %v1468
        %v1522 = vpack.c.b16 %v1471, %v1470
        %v1523 = vpack.c.b16 %v1473, %v1472
        %v1524 = vpack.c.b16 %v1475, %v1474
        %v1525 = vpack.c.b16 %v1477, %v1476
        %v1526 = vpack.c.b16 %v1479, %v1478
        %v1527 = vpack.c.b16 %v1481, %v1480
        %v1528 = vpack.c.b16 %v1483, %v1482
        %v1529 = vpack.c.b16 %v1485, %v1484
        %v1530 = vpack.c.b16 %v1487, %v1486
        %v1531 = vpack.c.b16 %v1489, %v1488
        %v1532 = vpack.c.b16 %v1491, %v1490
        %v1533 = vpack.c.b16 %v1493, %v1492
        %v1534 = vpack.c.b16 %v1495, %v1494
        %v1535 = vpack.c.b16 %v1497, %v1496
        %v1536 = vpack.c.b16 %v1499, %v1498
        %v1537 = vpack.c.b16 %v1501, %v1500
        %v1538 = vpack.c.b16 %v1503, %v1502
        %v1539 = vpack.c.b16 %v1505, %v1504
        %v1540 = vpack.c.b16 %v1507, %v1506
        %v1541 = vpack.c.b16 %v1509, %v1508
        %1574 = vmatpush.bf16.msra.mxu0 %v1517
        %1575 = vmatpush.bf16.msra.mxu0 %v1516
        %1576 = vmatpush.bf16.msra.mxu0 %v1515
        %1577 = vmatpush.bf16.msra.mxu0 %v1514
        %1578 = vmatpush.bf16.msra.mxu0 %v1513
        %1579 = vmatpush.bf16.msra.mxu0 %v1512
        %1580 = vmatpush.bf16.msra.mxu0 %v1511
        %1581 = vmatpush.bf16.msra.mxu0 %v1510
        %1582 = vmatmul.bf16.gmra.mxu0 %v1254
        %v1583 = vpop.f32.mrf.mxu0
        %v1584 = vadd.f32 %v1060, %v1583
        %v1585 = vpop.f32.mrf.mxu0
        %v1586 = vadd.f32 %v1060, %v1585
        %1587 = vmatmul.bf16.gmra.mxu0 %v1258
        %v1588 = vpop.f32.mrf.mxu0
        %v1589 = vadd.f32 %v1060, %v1588
        %v1590 = vpop.f32.mrf.mxu0
        %v1591 = vadd.f32 %v1060, %v1590
        %1592 = vmatmul.bf16.gmra.mxu0 %v1262
        %v1593 = vpop.f32.mrf.mxu0
        %v1594 = vadd.f32 %v1060, %v1593
        %v1595 = vpop.f32.mrf.mxu0
        %v1596 = vadd.f32 %v1060, %v1595
        %1597 = vmatmul.bf16.gmra.mxu0 %v1266
        %v1598 = vpop.f32.mrf.mxu0
        %v1599 = vadd.f32 %v1060, %v1598
        %v1600 = vpop.f32.mrf.mxu0
        %v1601 = vadd.f32 %v1060, %v1600
        %1602 = vmatmul.bf16.gmra.mxu0 %v1270
        %v1603 = vpop.f32.mrf.mxu0
        %v1604 = vadd.f32 %v1060, %v1603
        %v1605 = vpop.f32.mrf.mxu0
        %v1606 = vadd.f32 %v1060, %v1605
        %1607 = vmatmul.bf16.gmra.mxu0 %v1274
        %v1608 = vpop.f32.mrf.mxu0
        %v1609 = vadd.f32 %v1060, %v1608
        %v1610 = vpop.f32.mrf.mxu0
        %v1611 = vadd.f32 %v1060, %v1610
        %1612 = vmatmul.bf16.gmra.mxu0 %v1278
        %v1613 = vpop.f32.mrf.mxu0
        %v1614 = vadd.f32 %v1060, %v1613
        %v1615 = vpop.f32.mrf.mxu0
        %v1616 = vadd.f32 %v1060, %v1615
        %1617 = vmatmul.bf16.gmra.mxu0 %v1282
        %v1618 = vpop.f32.mrf.mxu0
        %v1619 = vadd.f32 %v1060, %v1618
        %v1620 = vpop.f32.mrf.mxu0
        %v1621 = vadd.f32 %v1060, %v1620
        %1622 = vmatmul.bf16.gmra.mxu0 %v1286
        %v1623 = vpop.f32.mrf.mxu0
        %v1624 = vadd.f32 %v1060, %v1623
        %v1625 = vpop.f32.mrf.mxu0
        %v1626 = vadd.f32 %v1060, %v1625
        %1627 = vmatmul.bf16.gmra.mxu0 %v1290
        %v1628 = vpop.f32.mrf.mxu0
        %v1629 = vadd.f32 %v1060, %v1628
        %v1630 = vpop.f32.mrf.mxu0
        %v1631 = vadd.f32 %v1060, %v1630
        %1632 = vmatmul.bf16.gmra.mxu0 %v1294
        %v1633 = vpop.f32.mrf.mxu0
        %v1634 = vadd.f32 %v1060, %v1633
        %v1635 = vpop.f32.mrf.mxu0
        %v1636 = vadd.f32 %v1060, %v1635
        %1637 = vmatmul.bf16.gmra.mxu0 %v1298
        %v1638 = vpop.f32.mrf.mxu0
        %v1639 = vadd.f32 %v1060, %v1638
        %v1640 = vpop.f32.mrf.mxu0
        %v1641 = vadd.f32 %v1060, %v1640
        %1642 = vmatmul.bf16.gmra.mxu0 %v1302
        %v1643 = vpop.f32.mrf.mxu0
        %v1644 = vadd.f32 %v1060, %v1643
        %v1645 = vpop.f32.mrf.mxu0
        %v1646 = vadd.f32 %v1060, %v1645
        %1647 = vmatmul.bf16.gmra.mxu0 %v1306
        %v1648 = vpop.f32.mrf.mxu0
        %v1649 = vadd.f32 %v1060, %v1648
        %v1650 = vpop.f32.mrf.mxu0
        %v1651 = vadd.f32 %v1060, %v1650
        %1652 = vmatmul.bf16.gmra.mxu0 %v1310
        %v1653 = vpop.f32.mrf.mxu0
        %v1654 = vadd.f32 %v1060, %v1653
        %v1655 = vpop.f32.mrf.mxu0
        %v1656 = vadd.f32 %v1060, %v1655
        %1657 = vmatmul.bf16.gmra.mxu0 %v1314
        %v1658 = vpop.f32.mrf.mxu0
        %v1659 = vadd.f32 %v1060, %v1658
        %v1660 = vpop.f32.mrf.mxu0
        %v1661 = vadd.f32 %v1060, %v1660
        %1662 = vdwg.mxu0
        %1663 = vmatpush.bf16.msra.mxu0 %v1525
        %1664 = vmatpush.bf16.msra.mxu0 %v1524
        %1665 = vmatpush.bf16.msra.mxu0 %v1523
        %1666 = vmatpush.bf16.msra.mxu0 %v1522
        %1667 = vmatpush.bf16.msra.mxu0 %v1521
        %1668 = vmatpush.bf16.msra.mxu0 %v1520
        %1669 = vmatpush.bf16.msra.mxu0 %v1519
        %1670 = vmatpush.bf16.msra.mxu0 %v1518
        %1671 = vmatmul.bf16.gmra.mxu0 %v1255
        %v1672 = vpop.f32.mrf.mxu0
        %v1673 = vadd.f32 %v1584, %v1672
        %v1674 = vpop.f32.mrf.mxu0
        %v1675 = vadd.f32 %v1586, %v1674
        %1676 = vmatmul.bf16.gmra.mxu0 %v1259
        %v1677 = vpop.f32.mrf.mxu0
        %v1678 = vadd.f32 %v1589, %v1677
        %v1679 = vpop.f32.mrf.mxu0
        %v1680 = vadd.f32 %v1591, %v1679
        %1681 = vmatmul.bf16.gmra.mxu0 %v1263
        %v1682 = vpop.f32.mrf.mxu0
        %v1683 = vadd.f32 %v1594, %v1682
        %v1684 = vpop.f32.mrf.mxu0
        %v1685 = vadd.f32 %v1596, %v1684
        %1686 = vmatmul.bf16.gmra.mxu0 %v1267
        %v1687 = vpop.f32.mrf.mxu0
        %v1688 = vadd.f32 %v1599, %v1687
        %v1689 = vpop.f32.mrf.mxu0
        %v1690 = vadd.f32 %v1601, %v1689
        %1691 = vmatmul.bf16.gmra.mxu0 %v1271
        %v1692 = vpop.f32.mrf.mxu0
        %v1693 = vadd.f32 %v1604, %v1692
        %v1694 = vpop.f32.mrf.mxu0
        %v1695 = vadd.f32 %v1606, %v1694
        %1696 = vmatmul.bf16.gmra.mxu0 %v1275
        %v1697 = vpop.f32.mrf.mxu0
        %v1698 = vadd.f32 %v1609, %v1697
        %v1699 = vpop.f32.mrf.mxu0
        %v1700 = vadd.f32 %v1611, %v1699
        %1701 = vmatmul.bf16.gmra.mxu0 %v1279
        %v1702 = vpop.f32.mrf.mxu0
        %v1703 = vadd.f32 %v1614, %v1702
        %v1704 = vpop.f32.mrf.mxu0
        %v1705 = vadd.f32 %v1616, %v1704
        %1706 = vmatmul.bf16.gmra.mxu0 %v1283
        %v1707 = vpop.f32.mrf.mxu0
        %v1708 = vadd.f32 %v1619, %v1707
        %v1709 = vpop.f32.mrf.mxu0
        %v1710 = vadd.f32 %v1621, %v1709
        %1711 = vmatmul.bf16.gmra.mxu0 %v1287
        %v1712 = vpop.f32.mrf.mxu0
        %v1713 = vadd.f32 %v1624, %v1712
        %v1714 = vpop.f32.mrf.mxu0
        %v1715 = vadd.f32 %v1626, %v1714
        %1716 = vmatmul.bf16.gmra.mxu0 %v1291
        %v1717 = vpop.f32.mrf.mxu0
        %v1718 = vadd.f32 %v1629, %v1717
        %v1719 = vpop.f32.mrf.mxu0
        %v1720 = vadd.f32 %v1631, %v1719
        %1721 = vmatmul.bf16.gmra.mxu0 %v1295
        %v1722 = vpop.f32.mrf.mxu0
        %v1723 = vadd.f32 %v1634, %v1722
        %v1724 = vpop.f32.mrf.mxu0
        %v1725 = vadd.f32 %v1636, %v1724
        %1726 = vmatmul.bf16.gmra.mxu0 %v1299
        %v1727 = vpop.f32.mrf.mxu0
        %v1728 = vadd.f32 %v1639, %v1727
        %v1729 = vpop.f32.mrf.mxu0
        %v1730 = vadd.f32 %v1641, %v1729
        %1731 = vmatmul.bf16.gmra.mxu0 %v1303
        %v1732 = vpop.f32.mrf.mxu0
        %v1733 = vadd.f32 %v1644, %v1732
        %v1734 = vpop.f32.mrf.mxu0
        %v1735 = vadd.f32 %v1646, %v1734
        %1736 = vmatmul.bf16.gmra.mxu0 %v1307
        %v1737 = vpop.f32.mrf.mxu0
        %v1738 = vadd.f32 %v1649, %v1737
        %v1739 = vpop.f32.mrf.mxu0
        %v1740 = vadd.f32 %v1651, %v1739
        %1741 = vmatmul.bf16.gmra.mxu0 %v1311
        %v1742 = vpop.f32.mrf.mxu0
        %v1743 = vadd.f32 %v1654, %v1742
        %v1744 = vpop.f32.mrf.mxu0
        %v1745 = vadd.f32 %v1656, %v1744
        %1746 = vmatmul.bf16.gmra.mxu0 %v1315
        %v1747 = vpop.f32.mrf.mxu0
        %v1748 = vadd.f32 %v1659, %v1747
        %v1749 = vpop.f32.mrf.mxu0
        %v1750 = vadd.f32 %v1661, %v1749
        %1751 = vdwg.mxu0
        %1752 = vmatpush.bf16.msra.mxu0 %v1533
        %1753 = vmatpush.bf16.msra.mxu0 %v1532
        %1754 = vmatpush.bf16.msra.mxu0 %v1531
        %1755 = vmatpush.bf16.msra.mxu0 %v1530
        %1756 = vmatpush.bf16.msra.mxu0 %v1529
        %1757 = vmatpush.bf16.msra.mxu0 %v1528
        %1758 = vmatpush.bf16.msra.mxu0 %v1527
        %1759 = vmatpush.bf16.msra.mxu0 %v1526
        %1760 = vmatmul.bf16.gmra.mxu0 %v1256
        %v1761 = vpop.f32.mrf.mxu0
        %v1762 = vadd.f32 %v1673, %v1761
        %v1763 = vpop.f32.mrf.mxu0
        %v1764 = vadd.f32 %v1675, %v1763
        %1765 = vmatmul.bf16.gmra.mxu0 %v1260
        %v1766 = vpop.f32.mrf.mxu0
        %v1767 = vadd.f32 %v1678, %v1766
        %v1768 = vpop.f32.mrf.mxu0
        %v1769 = vadd.f32 %v1680, %v1768
        %1770 = vmatmul.bf16.gmra.mxu0 %v1264
        %v1771 = vpop.f32.mrf.mxu0
        %v1772 = vadd.f32 %v1683, %v1771
        %v1773 = vpop.f32.mrf.mxu0
        %v1774 = vadd.f32 %v1685, %v1773
        %1775 = vmatmul.bf16.gmra.mxu0 %v1268
        %v1776 = vpop.f32.mrf.mxu0
        %v1777 = vadd.f32 %v1688, %v1776
        %v1778 = vpop.f32.mrf.mxu0
        %v1779 = vadd.f32 %v1690, %v1778
        %1780 = vmatmul.bf16.gmra.mxu0 %v1272
        %v1781 = vpop.f32.mrf.mxu0
        %v1782 = vadd.f32 %v1693, %v1781
        %v1783 = vpop.f32.mrf.mxu0
        %v1784 = vadd.f32 %v1695, %v1783
        %1785 = vmatmul.bf16.gmra.mxu0 %v1276
        %v1786 = vpop.f32.mrf.mxu0
        %v1787 = vadd.f32 %v1698, %v1786
        %v1788 = vpop.f32.mrf.mxu0
        %v1789 = vadd.f32 %v1700, %v1788
        %1790 = vmatmul.bf16.gmra.mxu0 %v1280
        %v1791 = vpop.f32.mrf.mxu0
        %v1792 = vadd.f32 %v1703, %v1791
        %v1793 = vpop.f32.mrf.mxu0
        %v1794 = vadd.f32 %v1705, %v1793
        %1795 = vmatmul.bf16.gmra.mxu0 %v1284
        %v1796 = vpop.f32.mrf.mxu0
        %v1797 = vadd.f32 %v1708, %v1796
        %v1798 = vpop.f32.mrf.mxu0
        %v1799 = vadd.f32 %v1710, %v1798
        %1800 = vmatmul.bf16.gmra.mxu0 %v1288
        %v1801 = vpop.f32.mrf.mxu0
        %v1802 = vadd.f32 %v1713, %v1801
        %v1803 = vpop.f32.mrf.mxu0
        %v1804 = vadd.f32 %v1715, %v1803
        %1805 = vmatmul.bf16.gmra.mxu0 %v1292
        %v1806 = vpop.f32.mrf.mxu0
        %v1807 = vadd.f32 %v1718, %v1806
        %v1808 = vpop.f32.mrf.mxu0
        %v1809 = vadd.f32 %v1720, %v1808
        %1810 = vmatmul.bf16.gmra.mxu0 %v1296
        %v1811 = vpop.f32.mrf.mxu0
        %v1812 = vadd.f32 %v1723, %v1811
        %v1813 = vpop.f32.mrf.mxu0
        %v1814 = vadd.f32 %v1725, %v1813
        %1815 = vmatmul.bf16.gmra.mxu0 %v1300
        %v1816 = vpop.f32.mrf.mxu0
        %v1817 = vadd.f32 %v1728, %v1816
        %v1818 = vpop.f32.mrf.mxu0
        %v1819 = vadd.f32 %v1730, %v1818
        %1820 = vmatmul.bf16.gmra.mxu0 %v1304
        %v1821 = vpop.f32.mrf.mxu0
        %v1822 = vadd.f32 %v1733, %v1821
        %v1823 = vpop.f32.mrf.mxu0
        %v1824 = vadd.f32 %v1735, %v1823
        %1825 = vmatmul.bf16.gmra.mxu0 %v1308
        %v1826 = vpop.f32.mrf.mxu0
        %v1827 = vadd.f32 %v1738, %v1826
        %v1828 = vpop.f32.mrf.mxu0
        %v1829 = vadd.f32 %v1740, %v1828
        %1830 = vmatmul.bf16.gmra.mxu0 %v1312
        %v1831 = vpop.f32.mrf.mxu0
        %v1832 = vadd.f32 %v1743, %v1831
        %v1833 = vpop.f32.mrf.mxu0
        %v1834 = vadd.f32 %v1745, %v1833
        %1835 = vmatmul.bf16.gmra.mxu0 %v1316
        %v1836 = vpop.f32.mrf.mxu0
        %v1837 = vadd.f32 %v1748, %v1836
        %v1838 = vpop.f32.mrf.mxu0
        %v1839 = vadd.f32 %v1750, %v1838
        %1840 = vdwg.mxu0
        %1841 = vmatpush.bf16.msra.mxu0 %v1541
        %1842 = vmatpush.bf16.msra.mxu0 %v1540
        %1843 = vmatpush.bf16.msra.mxu0 %v1539
        %1844 = vmatpush.bf16.msra.mxu0 %v1538
        %1845 = vmatpush.bf16.msra.mxu0 %v1537
        %1846 = vmatpush.bf16.msra.mxu0 %v1536
        %1847 = vmatpush.bf16.msra.mxu0 %v1535
        %1848 = vmatpush.bf16.msra.mxu0 %v1534
        %1849 = vmatmul.bf16.gmra.mxu0 %v1257
        %v1850 = vpop.f32.mrf.mxu0
        %v1851 = vadd.f32 %v1762, %v1850
        %v1852 = vpop.f32.mrf.mxu0
        %v1853 = vadd.f32 %v1764, %v1852
        %1854 = vmatmul.bf16.gmra.mxu0 %v1261
        %v1855 = vpop.f32.mrf.mxu0
        %v1856 = vadd.f32 %v1767, %v1855
        %v1857 = vpop.f32.mrf.mxu0
        %v1858 = vadd.f32 %v1769, %v1857
        %1859 = vmatmul.bf16.gmra.mxu0 %v1265
        %v1860 = vpop.f32.mrf.mxu0
        %v1861 = vadd.f32 %v1772, %v1860
        %v1862 = vpop.f32.mrf.mxu0
        %v1863 = vadd.f32 %v1774, %v1862
        %1864 = vmatmul.bf16.gmra.mxu0 %v1269
        %v1865 = vpop.f32.mrf.mxu0
        %v1866 = vadd.f32 %v1777, %v1865
        %v1867 = vpop.f32.mrf.mxu0
        %v1868 = vadd.f32 %v1779, %v1867
        %1869 = vmatmul.bf16.gmra.mxu0 %v1273
        %v1870 = vpop.f32.mrf.mxu0
        %v1871 = vadd.f32 %v1782, %v1870
        %v1872 = vpop.f32.mrf.mxu0
        %v1873 = vadd.f32 %v1784, %v1872
        %1874 = vmatmul.bf16.gmra.mxu0 %v1277
        %v1875 = vpop.f32.mrf.mxu0
        %v1876 = vadd.f32 %v1787, %v1875
        %v1877 = vpop.f32.mrf.mxu0
        %v1878 = vadd.f32 %v1789, %v1877
        %1879 = vmatmul.bf16.gmra.mxu0 %v1281
        %v1880 = vpop.f32.mrf.mxu0
        %v1881 = vadd.f32 %v1792, %v1880
        %v1882 = vpop.f32.mrf.mxu0
        %v1883 = vadd.f32 %v1794, %v1882
        %1884 = vmatmul.bf16.gmra.mxu0 %v1285
        %v1885 = vpop.f32.mrf.mxu0
        %v1886 = vadd.f32 %v1797, %v1885
        %v1887 = vpop.f32.mrf.mxu0
        %v1888 = vadd.f32 %v1799, %v1887
        %1889 = vmatmul.bf16.gmra.mxu0 %v1289
        %v1890 = vpop.f32.mrf.mxu0
        %v1891 = vadd.f32 %v1802, %v1890
        %v1892 = vpop.f32.mrf.mxu0
        %v1893 = vadd.f32 %v1804, %v1892
        %1894 = vmatmul.bf16.gmra.mxu0 %v1293
        %v1895 = vpop.f32.mrf.mxu0
        %v1896 = vadd.f32 %v1807, %v1895
        %v1897 = vpop.f32.mrf.mxu0
        %v1898 = vadd.f32 %v1809, %v1897
        %1899 = vmatmul.bf16.gmra.mxu0 %v1297
        %v1900 = vpop.f32.mrf.mxu0
        %v1901 = vadd.f32 %v1812, %v1900
        %v1902 = vpop.f32.mrf.mxu0
        %v1903 = vadd.f32 %v1814, %v1902
        %1904 = vmatmul.bf16.gmra.mxu0 %v1301
        %v1905 = vpop.f32.mrf.mxu0
        %v1906 = vadd.f32 %v1817, %v1905
        %v1907 = vpop.f32.mrf.mxu0
        %v1908 = vadd.f32 %v1819, %v1907
        %1909 = vmatmul.bf16.gmra.mxu0 %v1305
        %v1910 = vpop.f32.mrf.mxu0
        %v1911 = vadd.f32 %v1822, %v1910
        %v1912 = vpop.f32.mrf.mxu0
        %v1913 = vadd.f32 %v1824, %v1912
        %1914 = vmatmul.bf16.gmra.mxu0 %v1309
        %v1915 = vpop.f32.mrf.mxu0
        %v1916 = vadd.f32 %v1827, %v1915
        %v1917 = vpop.f32.mrf.mxu0
        %v1918 = vadd.f32 %v1829, %v1917
        %1919 = vmatmul.bf16.gmra.mxu0 %v1313
        %v1920 = vpop.f32.mrf.mxu0
        %v1921 = vadd.f32 %v1832, %v1920
        %v1922 = vpop.f32.mrf.mxu0
        %v1923 = vadd.f32 %v1834, %v1922
        %1924 = vmatmul.bf16.gmra.mxu0 %v1317
        %v1925 = vpop.f32.mrf.mxu0
        %v1926 = vadd.f32 %v1837, %v1925
        %v1927 = vpop.f32.mrf.mxu0
        %v1928 = vadd.f32 %v1839, %v1927
        %1929 = vdwg.mxu0
        %1930 = vst [vmem:[%s289] sm:$0xff] %v1851
        %1931 = vst [vmem:[%s289 + $0x8] sm:$0xff] %v1853
        %1932 = vst [vmem:[%s289 + $0x10] sm:$0xff] %v1856
        %1933 = vst [vmem:[%s289 + $0x18] sm:$0xff] %v1858
        %1934 = vst [vmem:[%s289 + $0x20] sm:$0xff] %v1861
        %1935 = vst [vmem:[%s289 + $0x28] sm:$0xff] %v1863
        %1936 = vst [vmem:[%s289 + $0x30] sm:$0xff] %v1866
        %1937 = vst [vmem:[%s289 + $0x38] sm:$0xff] %v1868
        %1938 = vst [vmem:[%s289 + $0x40] sm:$0xff] %v1871
        %1939 = vst [vmem:[%s289 + $0x48] sm:$0xff] %v1873
        %1940 = vst [vmem:[%s289 + $0x50] sm:$0xff] %v1876
        %1941 = vst [vmem:[%s289 + $0x58] sm:$0xff] %v1878
        %1942 = vst [vmem:[%s289 + $0x60] sm:$0xff] %v1881
        %1943 = vst [vmem:[%s289 + $0x68] sm:$0xff] %v1883
        %1944 = vst [vmem:[%s289 + $0x70] sm:$0xff] %v1886
        %1945 = vst [vmem:[%s289 + $0x78] sm:$0xff] %v1888
        %1946 = vst [vmem:[%s289 + $0x80] sm:$0xff] %v1891
        %1947 = vst [vmem:[%s289 + $0x88] sm:$0xff] %v1893
        %1948 = vst [vmem:[%s289 + $0x90] sm:$0xff] %v1896
        %1949 = vst [vmem:[%s289 + $0x98] sm:$0xff] %v1898
        %1950 = vst [vmem:[%s289 + $0xa0] sm:$0xff] %v1901
        %1951 = vst [vmem:[%s289 + $0xa8] sm:$0xff] %v1903
        %1952 = vst [vmem:[%s289 + $0xb0] sm:$0xff] %v1906
        %1953 = vst [vmem:[%s289 + $0xb8] sm:$0xff] %v1908
        %1954 = vst [vmem:[%s289 + $0xc0] sm:$0xff] %v1911
        %1955 = vst [vmem:[%s289 + $0xc8] sm:$0xff] %v1913
        %1956 = vst [vmem:[%s289 + $0xd0] sm:$0xff] %v1916
        %1957 = vst [vmem:[%s289 + $0xd8] sm:$0xff] %v1918
        %1958 = vst [vmem:[%s289 + $0xe0] sm:$0xff] %v1921
        %1959 = vst [vmem:[%s289 + $0xe8] sm:$0xff] %v1923
        %1960 = vst [vmem:[%s289 + $0xf0] sm:$0xff] %v1926
        %1961 = vst [vmem:[%s289 + $0xf8] sm:$0xff] %v1928
        %s1962 = sand.u32 %s145, 1
        %s1963 = scalar_lea.sflag [#allocation5], %s1962
        %s1964 = sand.u32 %s145, 1
        %s1965 = smul.addr %s1964, 256
        %s1966 = scalar_lea.vmem [#allocation9], %s1965
        // Predicated region
        $region53: #{tpu_custom_call.1} parent=35 // pred_check
          %p1967 = pneg %p155
        $region54: #{tpu_custom_call.1} parent=35 // pred_check_branch
          %1969 = sbr.rel (%p1967) target = $region56
        $region55: #{tpu_custom_call.1} parent=35 // pred_region
          %s1970 = smul.u32 %s24, 2
          %s1971 = sadd.s32 %s1970, %s25
          %p1972 = scmp.lt.s32.totalorder %s1971, 1
          %s1973 = scalar_select %p1972, %s1971, 1
          %s1974 = smul.u32 32, %s1973
          %s1975 = ssub.s32 63, %s1974
          %p1976 = scmp.lt.s32.totalorder %s1975, 32
          %s1977 = scalar_select %p1976, %s1975, 32
          %s1978 = smul.u32 8, %s1977
          %s1979 = ssub.s32 256, %s1978
          %s1980 = sshll.u32 %s1979, 4
          %1981 = vsyncadd %s1963, %s1980
          %p1982 = scmp.ne.s32.totalorder 0, %s1978
          %s1983 = smul.addr %s1974, 8
          %s1984 = scalar_lea.hbm %s4, %s1983
          %s1985 = smul.u32 8, %s1977
          %s1986 = sshll.u32 %s1966, 4
          %s1987 = int_to_ptr.vmem [resolvable:$true] %s1986
          %s1988 = sshll.u32 %s1984, 4
          %s1989 = int_to_ptr.hbm [resolvable:$true] %s1988
          %s1990 = sshll.u32 %s1985, 4
          %1994 = dma.vmem_to_hbm [thread:$0]  (%p1982), %s1987, %s1990, %s1989, %s1963, 128, 128, 8
        $region56: #{tpu_custom_call.1} parent=35 // pred_fallthru
          _
      $region36: #{tpu_custom_call.1} parent=5 // pred_fallthru
        _
      %p1995 = scmp.le.s32.totalorder 2, %s15
      // Predicated region
      $region57: #{tpu_custom_call.1} parent=5 // pred_check
        %p1996 = pneg %p1995
      $region58: #{tpu_custom_call.1} parent=5 // pred_check_branch
        %1998 = sbr.rel (%p1996) target = $region60
      $region59: #{tpu_custom_call.1} parent=5 // pred_region
        %s1999 = ssub.s32 %s15, 2
        // Predicated region
        $region61: #{tpu_custom_call.1} parent=59 // pred_check
          %p2000 = pneg %p161
        $region62: #{tpu_custom_call.1} parent=59 // pred_check_branch
          %2002 = sbr.rel (%p2000) target = $region64
        $region63: #{tpu_custom_call.1} parent=59 // pred_region
          %s2003 = sand.u32 %s146, 1
          %s2004 = scalar_lea.sflag [#allocation5], %s2003
          %s2005 = sand.u32 %s146, 1
          %s2006 = smul.addr %s2005, 256
          %s2007 = scalar_lea.vmem [#allocation9], %s2006
          %2009 = dma.done %s2004, 4096
        $region64: #{tpu_custom_call.1} parent=59 // pred_fallthru
          _
      $region60: #{tpu_custom_call.1} parent=5 // pred_fallthru
        _
    $region6: #{tpu_custom_call.1} parent=1 // loop_footer
      %s19 = sadd.s32 1, %s15
    $region7: #{tpu_custom_call.1} parent=1 // loop_footer_branch
      %14 = sbr.rel target = $region3
    $region8: #{tpu_custom_call.1} parent=1 // loop_exit
      _
    %2010 = vsyncpa [#allocation4], 1
    %s2011 = scalar_lea.sflag [#allocation4], 1
    %2012 = vsyncpa %s2011, 1
    %2013 = vsyncpa [#allocation7], 1
    %2014 = vsyncpa [#allocation5], 1
    %s2015 = scalar_lea.sflag [#allocation5], 1
    %2016 = vsyncpa %s2015, 1

</llo_original>
